<compile_context>
chip_gen: v7x
topology: tpu7x:2x2x1
jax: 0.10.0
libtpu: 0.0.40
codegen_flags: <defaults>
</compile_context>

<pallas_src>
import functools
import math

import jax
import jax.numpy as jnp
from jax.experimental import pallas as pl
from jax.experimental.pallas import tpu as pltpu

K = 8  # JPEG block size

# ---------------------------------------------------------------------------
# Deterministic "parameters" (standard DiffJPEG quantization tables / bases).
# ---------------------------------------------------------------------------
_Y_TABLE = jnp.array(
    [[16, 11, 10, 16, 24, 40, 51, 61],
     [12, 12, 14, 19, 26, 58, 60, 55],
     [14, 13, 16, 24, 40, 57, 69, 56],
     [14, 17, 22, 29, 51, 87, 80, 62],
     [18, 22, 37, 56, 68, 109, 103, 77],
     [24, 35, 55, 64, 81, 104, 113, 92],
     [49, 64, 78, 87, 103, 121, 120, 101],
     [72, 92, 95, 98, 112, 100, 103, 99]], dtype=jnp.float32).T


def _c_table():
    c = jnp.full((8, 8), 99.0, dtype=jnp.float32)
    top = jnp.array([[17, 18, 24, 47],
                     [18, 21, 26, 66],
                     [24, 26, 56, 99],
                     [47, 66, 99, 99]], dtype=jnp.float32).T
    return c.at[:4, :4].set(top)


_C_TABLE = _c_table()


def quality_to_factor(quality):
    if quality < 50:
        q = 5000.0 / quality
    else:
        q = 200.0 - quality * 2
    return q / 100.0


def _cos_basis():
    # D[x, u] = cos((2u+1) * x * pi / 16)
    n = jnp.arange(8, dtype=jnp.float32)
    return jnp.cos((2.0 * n[None, :] + 1.0) * n[:, None] * math.pi / 16.0)


def _alpha8():
    return jnp.array([1.0 / math.sqrt(2.0)] + [1.0] * 7, dtype=jnp.float32)


# ---------------------------------------------------------------------------
# Fused Pallas kernel: dequant + 8x8 IDCT + block merge + YCbCr->RGB
# ---------------------------------------------------------------------------
def _idct_color_kernel(x_ref, qs_ref, lh_ref, rw_ref, out_ref, *, cw):
    # x_ref:   (3, 1, TH, TW) quantized DCT coefficient planes (Y, Cb, Cr)
    # qs_ref:  (3, TH, TW)    per-channel dequant scale (qtab*factor*alpha), tiled
    # lh_ref:  (TH, TH)       block-diag 0.25 * D^T   (height-direction IDCT)
    # rw_ref:  (CW, CW)       block-diag D            (width-direction IDCT,
    #                         applied per 128-lane chunk; block-diagonal so
    #                         chunking is exact)
    # out_ref: (1, 3, TH, TW) RGB output in [0, 1]
    lh = lh_ref[...]
    rw = rw_ref[...]
    tw = x_ref.shape[3]

    # Height-direction IDCT on the dequantized coefficients (whole tile).
    ty = jnp.dot(lh, x_ref[0, 0] * qs_ref[0], preferred_element_type=jnp.float32)
    tcb = jnp.dot(lh, x_ref[1, 0] * qs_ref[1], preferred_element_type=jnp.float32)
    tcr = jnp.dot(lh, x_ref[2, 0] * qs_ref[2], preferred_element_type=jnp.float32)

    inv255 = 1.0 / 255.0
    # Width-direction IDCT + color transform + store, one 128-lane chunk at a
    # time (slices are 128-aligned => no relayout; stores are full-lane vst).
    for j in range(tw // cw):
        sl = slice(j * cw, (j + 1) * cw)
        # +128 only needed for Y; the +128/-128 pair cancels for Cb/Cr in the
        # color transform below.
        y = jnp.dot(ty[:, sl], rw, preferred_element_type=jnp.float32) + 128.0
        cb = jnp.dot(tcb[:, sl], rw, preferred_element_type=jnp.float32)
        cr = jnp.dot(tcr[:, sl], rw, preferred_element_type=jnp.float32)

        r = y + 1.402 * cr
        g = y - 0.344136 * cb - 0.714136 * cr
        b = y + 1.772 * cb

        out_ref[0, 0, :, sl] = jnp.minimum(255.0, jnp.maximum(0.0, r)) * inv255
        out_ref[0, 1, :, sl] = jnp.minimum(255.0, jnp.maximum(0.0, g)) * inv255
        out_ref[0, 2, :, sl] = jnp.minimum(255.0, jnp.maximum(0.0, b)) * inv255


def _pick_row_tile(h):
    # Largest multiple of 8 that divides H, capped at 128 (MXU contraction).
    best = K
    for t in range(K, min(h, 128) + 1, K):
        if h % t == 0:
            best = t
    return best


def _pick_col_tile(w):
    # Largest lane-dense (multiple-of-128) divisor of W up to 512, else full W.
    for t in (512, 384, 256, 128):
        if w % t == 0:
            return t
    return w


# ---------------------------------------------------------------------------
# Wrapper (IDCT.forward)
# ---------------------------------------------------------------------------
@functools.partial(jax.jit, static_argnames=("quality",))
def idct_forward(x, quality=75):
    """x: (B, H, W, 3) float32 -> (B, 3, H, W) float32 in [0, 1]."""
    B, H, W, C = x.shape
    assert C == 3 and H % K == 0 and W % K == 0
    factor = quality_to_factor(quality)

    th = _pick_row_tile(H)
    tw = _pick_col_tile(W)
    cw = 128 if tw % 128 == 0 else tw          # width-matmul chunk size

    x = x.astype(jnp.float32)
    # Layout plumbing only: channel-last (lane dim of 3) is hostile to the
    # 128-lane vreg layout, so present the data channel-major to the kernel.
    planes = jnp.transpose(x, (3, 0, 1, 2))                  # (3, B, H, W)

    # Per-channel dequant scale plane: qtab * factor * alpha_u * alpha_v,
    # tiled over the (TH, TW) tile.  (quant table is not rank-1, so it cannot
    # be folded into the separable basis matrices.)
    alpha = _alpha8()
    alpha2 = jnp.outer(alpha, alpha)                         # (8, 8)
    qs8 = jnp.stack([_Y_TABLE, _C_TABLE, _C_TABLE], axis=0) * factor * alpha2
    qscale = jnp.tile(qs8, (1, th // K, tw // K))            # (3, TH, TW)

    # Separable 8x8 IDCT as block-diagonal matrices; 0.25 folded into Lh.
    # The width-direction operator is the SAME (CW, CW) block-diag matrix for
    # every 128-lane chunk of the tile, so it is kept at 128x128 (or TW x TW
    # for narrow images) regardless of TW -> no MXU waste growth with TW.
    D = _cos_basis()                                         # D[x, u]
    lh = jnp.kron(jnp.eye(th // K, dtype=jnp.float32), 0.25 * D.T)   # (TH, TH)
    rw = jnp.kron(jnp.eye(cw // K, dtype=jnp.float32), D)            # (CW, CW)

    grid = (B, H // th, W // tw)
    kernel = functools.partial(_idct_color_kernel, cw=cw)
    out = pl.pallas_call(
        kernel,
        out_shape=jax.ShapeDtypeStruct((B, 3, H, W), jnp.float32),
        grid_spec=pltpu.PrefetchScalarGridSpec(
            num_scalar_prefetch=0,
            grid=grid,
            in_specs=[
                pl.BlockSpec((3, 1, th, tw), lambda b, i, j: (0, b, i, j)),
                # Constant index maps => resident in VMEM, no re-DMA per step.
                pl.BlockSpec((3, th, tw), lambda b, i, j: (0, 0, 0)),
                pl.BlockSpec((th, th), lambda b, i, j: (0, 0)),
                pl.BlockSpec((cw, cw), lambda b, i, j: (0, 0)),
            ],
            out_specs=pl.BlockSpec((1, 3, th, tw), lambda b, i, j: (b, 0, i, j)),
        ),
        compiler_params=pltpu.CompilerParams(
            # All grid axes independent; lets v7x shard across both TCs.
            dimension_semantics=("parallel", "parallel", "parallel")),
    )(planes, qscale, lh, rw)
    return out


# ---------------------------------------------------------------------------
# Pure-JAX reference (flat 64x64-basis formulation) for sanity checking
# ---------------------------------------------------------------------------
def _block_split(img):                       # (B, H, W) -> (B, H*W/64, 8, 8)
    B, H, W = img.shape
    x = img.reshape(B, H // K, K, W // K, K)
    x = jnp.transpose(x, (0, 1, 3, 2, 4))
    return x.reshape(B, -1, K, K)


def _block_merge(patches, H, W):             # (B, H*W/64, 8, 8) -> (B, H, W)
    B = patches.shape[0]
    x = patches.reshape(B, H // K, W // K, K, K)
    x = jnp.transpose(x, (0, 1, 3, 2, 4))
    return x.reshape(B, H, W)


def _reference(x, quality=75):
    B, H, W, _ = x.shape
    factor = quality_to_factor(quality)
    alpha_flat = jnp.outer(_alpha8(), _alpha8()).reshape(64)
    D = _cos_basis()
    basis = jnp.einsum("xu,yv->xyuv", D, D).reshape(64, 64)
    tables = [_Y_TABLE.reshape(64) * factor,
              _C_TABLE.reshape(64) * factor,
              _C_TABLE.reshape(64) * factor]
    planes = []
    for c in range(3):
        blk = _block_split(x[..., c]).reshape(-1, 64)
        blk = blk * tables[c] * alpha_flat
        blk = 0.25 * (blk @ basis) + 128.0
        planes.append(_block_merge(blk.reshape(B, -1, K, K), H, W))
    y, cb, cr = planes
    r = y + 1.402 * (cr - 128.0)
    g = y - 0.344136 * (cb - 128.0) - 0.714136 * (cr - 128.0)
    b = y + 1.772 * (cb - 128.0)
    rgb = jnp.stack([r, g, b], axis=1)  # NCHW
    return jnp.clip(rgb, 0.0, 255.0) / 255.0


if __name__ == "__main__":
    key = jax.random.PRNGKey(0)

    # --- small sanity shape (single tile per image, narrow-width fallback) ---
    B, H, W = 2, 16, 16
    x = jax.random.normal(key, (B, H, W, 3), dtype=jnp.float32) * 10.0
    out = jax.block_until_ready(idct_forward(x, quality=75))
    assert out.shape == (B, 3, H, W), out.shape
    assert out.dtype == jnp.float32
    ref = _reference(x, quality=75)
    assert jnp.all(jnp.isfinite(out))
    assert jnp.allclose(out, ref, atol=1e-2, rtol=1e-2), float(
        jnp.max(jnp.abs(out - ref)))

    # --- shape exercising the chunked width-direction matmul (tw=512, 4 chunks) ---
    B2, H2, W2 = 1, 48, 512
    x2 = jax.random.normal(jax.random.PRNGKey(1),
                           (B2, H2, W2, 3), dtype=jnp.float32) * 10.0
    out2 = jax.block_until_ready(idct_forward(x2, quality=75))
    ref2 = _reference(x2, quality=75)
    assert out2.shape == (B2, 3, H2, W2)
    assert jnp.all(jnp.isfinite(out2))
    assert jnp.allclose(out2, ref2, atol=1e-2, rtol=1e-2), float(
        jnp.max(jnp.abs(out2 - ref2)))

    # --- shape exercising a multi-tile grid along the row axis (th=128) ---
    B3, H3, W3 = 1, 256, 128
    x3 = jax.random.normal(jax.random.PRNGKey(2),
                           (B3, H3, W3, 3), dtype=jnp.float32) * 10.0
    out3 = jax.block_until_ready(idct_forward(x3, quality=75))
    ref3 = _reference(x3, quality=75)
    assert out3.shape == (B3, 3, H3, W3)
    assert jnp.all(jnp.isfinite(out3))
    assert jnp.allclose(out3, ref3, atol=1e-2, rtol=1e-2), float(
        jnp.max(jnp.abs(out3 - ref3)))

    print("KERNEL_OK")
</pallas_src>

<mosaic_0001>
module attributes {stable_mosaic.version = 11 : i64} {
  func.func @_idct_color_kernel(%arg0: i32, %arg1: i32, %arg2: i32, %arg3: memref<3x1x16x16xf32, #tpu.memory_space<vmem>>, %arg4: memref<3x16x16xf32, #tpu.memory_space<vmem>>, %arg5: memref<16x16xf32, #tpu.memory_space<vmem>>, %arg6: memref<16x16xf32, #tpu.memory_space<vmem>>, %arg7: memref<1x3x16x16xf32, #tpu.memory_space<vmem>>) attributes {dimension_semantics = [#tpu.dimension_semantics<parallel>, #tpu.dimension_semantics<parallel>, #tpu.dimension_semantics<parallel>], iteration_bounds = array<i64: 2, 1, 1>, scalar_prefetch = 0 : i64, scratch_operands = 0 : i64, tpu.core_type = #tpu.core_type<tc>, window_params = [{transform_indices = @transform_0, window_bounds = array<i64: 3, 1, 16, 16>}, {pipeline_mode = #tpu.pipeline_mode<synchronous>, transform_indices = @transform_1, window_bounds = array<i64: 3, 16, 16>}, {pipeline_mode = #tpu.pipeline_mode<synchronous>, transform_indices = @transform_2, window_bounds = array<i64: 16, 16>}, {pipeline_mode = #tpu.pipeline_mode<synchronous>, transform_indices = @transform_3, window_bounds = array<i64: 16, 16>}, {transform_indices = @transform_4, window_bounds = array<i64: 1, 3, 16, 16>}]} {
    %c0 = arith.constant 0 : index
    %c0_0 = arith.constant 0 : index
    %0 = vector.load %arg5[%c0, %c0_0] : memref<16x16xf32, #tpu.memory_space<vmem>>, vector<16x16xf32>
    %c0_1 = arith.constant 0 : index
    %c0_2 = arith.constant 0 : index
    %1 = vector.load %arg6[%c0_1, %c0_2] : memref<16x16xf32, #tpu.memory_space<vmem>>, vector<16x16xf32>
    %c0_3 = arith.constant 0 : index
    %c0_4 = arith.constant 0 : index
    %c0_5 = arith.constant 0 : index
    %c0_6 = arith.constant 0 : index
    %2 = vector.load %arg3[%c0_3, %c0_4, %c0_5, %c0_6] : memref<3x1x16x16xf32, #tpu.memory_space<vmem>>, vector<1x1x16x16xf32>
    %3 = vector.shape_cast %2 : vector<1x1x16x16xf32> to vector<16x16xf32>
    %c0_7 = arith.constant 0 : index
    %c0_8 = arith.constant 0 : index
    %c0_9 = arith.constant 0 : index
    %4 = vector.load %arg4[%c0_7, %c0_8, %c0_9] : memref<3x16x16xf32, #tpu.memory_space<vmem>>, vector<1x16x16xf32>
    %5 = vector.shape_cast %4 : vector<1x16x16xf32> to vector<16x16xf32>
    %6 = arith.mulf %3, %5 : vector<16x16xf32>
    %cst = arith.constant dense<0.000000e+00> : vector<16x16xf32>
    %7 = tpu.matmul %0, %6, %cst {dimension_numbers = #tpu.dot_dimension_numbers<[1], [0], [0], [1], [0, 0, 1, 1], [], []>} : vector<16x16xf32>, vector<16x16xf32>, vector<16x16xf32> -> vector<16x16xf32>
    %c1 = arith.constant 1 : index
    %c0_10 = arith.constant 0 : index
    %c0_11 = arith.constant 0 : index
    %c0_12 = arith.constant 0 : index
    %8 = vector.load %arg3[%c1, %c0_10, %c0_11, %c0_12] : memref<3x1x16x16xf32, #tpu.memory_space<vmem>>, vector<1x1x16x16xf32>
    %9 = vector.shape_cast %8 : vector<1x1x16x16xf32> to vector<16x16xf32>
    %c1_13 = arith.constant 1 : index
    %c0_14 = arith.constant 0 : index
    %c0_15 = arith.constant 0 : index
    %10 = vector.load %arg4[%c1_13, %c0_14, %c0_15] : memref<3x16x16xf32, #tpu.memory_space<vmem>>, vector<1x16x16xf32>
    %11 = vector.shape_cast %10 : vector<1x16x16xf32> to vector<16x16xf32>
    %12 = arith.mulf %9, %11 : vector<16x16xf32>
    %cst_16 = arith.constant dense<0.000000e+00> : vector<16x16xf32>
    %13 = tpu.matmul %0, %12, %cst_16 {dimension_numbers = #tpu.dot_dimension_numbers<[1], [0], [0], [1], [0, 0, 1, 1], [], []>} : vector<16x16xf32>, vector<16x16xf32>, vector<16x16xf32> -> vector<16x16xf32>
    %c2 = arith.constant 2 : index
    %c0_17 = arith.constant 0 : index
    %c0_18 = arith.constant 0 : index
    %c0_19 = arith.constant 0 : index
    %14 = vector.load %arg3[%c2, %c0_17, %c0_18, %c0_19] : memref<3x1x16x16xf32, #tpu.memory_space<vmem>>, vector<1x1x16x16xf32>
    %15 = vector.shape_cast %14 : vector<1x1x16x16xf32> to vector<16x16xf32>
    %c2_20 = arith.constant 2 : index
    %c0_21 = arith.constant 0 : index
    %c0_22 = arith.constant 0 : index
    %16 = vector.load %arg4[%c2_20, %c0_21, %c0_22] : memref<3x16x16xf32, #tpu.memory_space<vmem>>, vector<1x16x16xf32>
    %17 = vector.shape_cast %16 : vector<1x16x16xf32> to vector<16x16xf32>
    %18 = arith.mulf %15, %17 : vector<16x16xf32>
    %cst_23 = arith.constant dense<0.000000e+00> : vector<16x16xf32>
    %19 = tpu.matmul %0, %18, %cst_23 {dimension_numbers = #tpu.dot_dimension_numbers<[1], [0], [0], [1], [0, 0, 1, 1], [], []>} : vector<16x16xf32>, vector<16x16xf32>, vector<16x16xf32> -> vector<16x16xf32>
    %cst_24 = arith.constant dense<0.000000e+00> : vector<16x16xf32>
    %20 = tpu.matmul %7, %1, %cst_24 {dimension_numbers = #tpu.dot_dimension_numbers<[1], [0], [0], [1], [0, 0, 1, 1], [], []>} : vector<16x16xf32>, vector<16x16xf32>, vector<16x16xf32> -> vector<16x16xf32>
    %cst_25 = arith.constant 1.280000e+02 : f32
    %21 = vector.broadcast %cst_25 : f32 to vector<16x16xf32>
    %22 = arith.addf %20, %21 : vector<16x16xf32>
    %cst_26 = arith.constant dense<0.000000e+00> : vector<16x16xf32>
    %23 = tpu.matmul %13, %1, %cst_26 {dimension_numbers = #tpu.dot_dimension_numbers<[1], [0], [0], [1], [0, 0, 1, 1], [], []>} : vector<16x16xf32>, vector<16x16xf32>, vector<16x16xf32> -> vector<16x16xf32>
    %cst_27 = arith.constant dense<0.000000e+00> : vector<16x16xf32>
    %24 = tpu.matmul %19, %1, %cst_27 {dimension_numbers = #tpu.dot_dimension_numbers<[1], [0], [0], [1], [0, 0, 1, 1], [], []>} : vector<16x16xf32>, vector<16x16xf32>, vector<16x16xf32> -> vector<16x16xf32>
    %cst_28 = arith.constant 1.402000e+00 : f32
    %25 = vector.broadcast %cst_28 : f32 to vector<16x16xf32>
    %26 = arith.mulf %25, %24 : vector<16x16xf32>
    %27 = arith.addf %22, %26 : vector<16x16xf32>
    %cst_29 = arith.constant 3.441360e-01 : f32
    %28 = vector.broadcast %cst_29 : f32 to vector<16x16xf32>
    %29 = arith.mulf %28, %23 : vector<16x16xf32>
    %30 = arith.subf %22, %29 : vector<16x16xf32>
    %cst_30 = arith.constant 7.141360e-01 : f32
    %31 = vector.broadcast %cst_30 : f32 to vector<16x16xf32>
    %32 = arith.mulf %31, %24 : vector<16x16xf32>
    %33 = arith.subf %30, %32 : vector<16x16xf32>
    %cst_31 = arith.constant 1.772000e+00 : f32
    %34 = vector.broadcast %cst_31 : f32 to vector<16x16xf32>
    %35 = arith.mulf %34, %23 : vector<16x16xf32>
    %36 = arith.addf %22, %35 : vector<16x16xf32>
    %cst_32 = arith.constant 0.000000e+00 : f32
    %37 = vector.broadcast %cst_32 : f32 to vector<16x16xf32>
    %38 = arith.maximumf %37, %27 : vector<16x16xf32>
    %cst_33 = arith.constant 2.550000e+02 : f32
    %39 = vector.broadcast %cst_33 : f32 to vector<16x16xf32>
    %40 = arith.minimumf %39, %38 : vector<16x16xf32>
    %cst_34 = arith.constant 0.00392156886 : f32
    %41 = vector.broadcast %cst_34 : f32 to vector<16x16xf32>
    %42 = arith.mulf %40, %41 : vector<16x16xf32>
    %c0_35 = arith.constant 0 : index
    %c0_36 = arith.constant 0 : index
    %c0_37 = arith.constant 0 : index
    %c0_38 = arith.constant 0 : index
    %43 = vector.load %arg7[%c0_35, %c0_36, %c0_37, %c0_38] : memref<1x3x16x16xf32, #tpu.memory_space<vmem>>, vector<1x1x16x16xf32>
    %44 = vector.shape_cast %43 : vector<1x1x16x16xf32> to vector<16x16xf32>
    %45 = vector.shape_cast %42 : vector<16x16xf32> to vector<1x1x16x16xf32>
    tpu.vector_store %arg7[%c0_35, %c0_36, %c0_37, %c0_38], %45 {strides = array<i32>} : memref<1x3x16x16xf32, #tpu.memory_space<vmem>>, vector<1x1x16x16xf32>,
    %cst_39 = arith.constant 0.000000e+00 : f32
    %46 = vector.broadcast %cst_39 : f32 to vector<16x16xf32>
    %47 = arith.maximumf %46, %33 : vector<16x16xf32>
    %cst_40 = arith.constant 2.550000e+02 : f32
    %48 = vector.broadcast %cst_40 : f32 to vector<16x16xf32>
    %49 = arith.minimumf %48, %47 : vector<16x16xf32>
    %cst_41 = arith.constant 0.00392156886 : f32
    %50 = vector.broadcast %cst_41 : f32 to vector<16x16xf32>
    %51 = arith.mulf %49, %50 : vector<16x16xf32>
    %c0_42 = arith.constant 0 : index
    %c1_43 = arith.constant 1 : index
    %c0_44 = arith.constant 0 : index
    %c0_45 = arith.constant 0 : index
    %52 = vector.load %arg7[%c0_42, %c1_43, %c0_44, %c0_45] : memref<1x3x16x16xf32, #tpu.memory_space<vmem>>, vector<1x1x16x16xf32>
    %53 = vector.shape_cast %52 : vector<1x1x16x16xf32> to vector<16x16xf32>
    %54 = vector.shape_cast %51 : vector<16x16xf32> to vector<1x1x16x16xf32>
    tpu.vector_store %arg7[%c0_42, %c1_43, %c0_44, %c0_45], %54 {strides = array<i32>} : memref<1x3x16x16xf32, #tpu.memory_space<vmem>>, vector<1x1x16x16xf32>,
    %cst_46 = arith.constant 0.000000e+00 : f32
    %55 = vector.broadcast %cst_46 : f32 to vector<16x16xf32>
    %56 = arith.maximumf %55, %36 : vector<16x16xf32>
    %cst_47 = arith.constant 2.550000e+02 : f32
    %57 = vector.broadcast %cst_47 : f32 to vector<16x16xf32>
    %58 = arith.minimumf %57, %56 : vector<16x16xf32>
    %cst_48 = arith.constant 0.00392156886 : f32
    %59 = vector.broadcast %cst_48 : f32 to vector<16x16xf32>
    %60 = arith.mulf %58, %59 : vector<16x16xf32>
    %c0_49 = arith.constant 0 : index
    %c2_50 = arith.constant 2 : index
    %c0_51 = arith.constant 0 : index
    %c0_52 = arith.constant 0 : index
    %61 = vector.load %arg7[%c0_49, %c2_50, %c0_51, %c0_52] : memref<1x3x16x16xf32, #tpu.memory_space<vmem>>, vector<1x1x16x16xf32>
    %62 = vector.shape_cast %61 : vector<1x1x16x16xf32> to vector<16x16xf32>
    %63 = vector.shape_cast %60 : vector<16x16xf32> to vector<1x1x16x16xf32>
    tpu.vector_store %arg7[%c0_49, %c2_50, %c0_51, %c0_52], %63 {strides = array<i32>} : memref<1x3x16x16xf32, #tpu.memory_space<vmem>>, vector<1x1x16x16xf32>,
    return
  }
  func.func @transform_0(%arg0: i32, %arg1: i32, %arg2: i32) -> (i32, i32, i32, i32) {
    %c0_i32 = arith.constant 0 : i32
    %c0_i32_0 = arith.constant 0 : i32
    return %c0_i32, %arg0, %arg1, %arg2 : i32, i32, i32, i32
  }
  func.func @transform_1(%arg0: i32, %arg1: i32, %arg2: i32) -> (i32, i32, i32) {
    %c0_i32 = arith.constant 0 : i32
    %c0_i32_0 = arith.constant 0 : i32
    %c0_i32_1 = arith.constant 0 : i32
    %c0_i32_2 = arith.constant 0 : i32
    return %c0_i32, %c0_i32_0, %c0_i32_1 : i32, i32, i32
  }
  func.func @transform_2(%arg0: i32, %arg1: i32, %arg2: i32) -> (i32, i32) {
    %c0_i32 = arith.constant 0 : i32
    %c0_i32_0 = arith.constant 0 : i32
    %c0_i32_1 = arith.constant 0 : i32
    return %c0_i32, %c0_i32_0 : i32, i32
  }
  func.func @transform_3(%arg0: i32, %arg1: i32, %arg2: i32) -> (i32, i32) {
    %c0_i32 = arith.constant 0 : i32
    %c0_i32_0 = arith.constant 0 : i32
    %c0_i32_1 = arith.constant 0 : i32
    return %c0_i32, %c0_i32_0 : i32, i32
  }
  func.func @transform_4(%arg0: i32, %arg1: i32, %arg2: i32) -> (i32, i32, i32, i32) {
    %c0_i32 = arith.constant 0 : i32
    %c0_i32_0 = arith.constant 0 : i32
    return %arg0, %c0_i32, %arg1, %arg2 : i32, i32, i32, i32
  }
}

</mosaic_0001>

<llo_original>
// kernel: tile.9
$region0: #{tile.9}
  %s0 = inlined_call_operand.vmem [shape: f32[3,2,8,2,8], index: 0, kind: input, shape index: {}]
  %s1 = inlined_call_operand.vmem [shape: f32[3,16,16], index: 1, kind: output, shape index: {}]
  $region1: #{tile.9} parent=0
    #allocation0 [shape = 'u8[196608]{0}', space=vmem, size = 0x30000, scoped, tag = 'scoped mem for input reshape']
    %s3 = sshllo.u32 0, 2
    %s4 = smul.addr 2, 47
    %s5 = scalar_lea.vmem %s0, %s4
    %v6 = vld [vmem:[%s5] sm:%s3]
    %s7 = scalar_lea.vmem [#allocation0], 376
    %8 = vst [vmem:[%s7] sm:%s3] %v6
    %s9 = smul.addr 2, 46
    %s10 = scalar_lea.vmem %s0, %s9
    %v11 = vld [vmem:[%s10] sm:%s3]
    %s12 = scalar_lea.vmem [#allocation0], 368
    %13 = vst [vmem:[%s12] sm:%s3] %v11
    %s14 = smul.addr 2, 45
    %s15 = scalar_lea.vmem %s0, %s14
    %v16 = vld [vmem:[%s15] sm:%s3]
    %s17 = scalar_lea.vmem [#allocation0], 360
    %18 = vst [vmem:[%s17] sm:%s3] %v16
    %s19 = smul.addr 2, 44
    %s20 = scalar_lea.vmem %s0, %s19
    %v21 = vld [vmem:[%s20] sm:%s3]
    %s22 = scalar_lea.vmem [#allocation0], 352
    %23 = vst [vmem:[%s22] sm:%s3] %v21
    %s24 = smul.addr 2, 43
    %s25 = scalar_lea.vmem %s0, %s24
    %v26 = vld [vmem:[%s25] sm:%s3]
    %s27 = scalar_lea.vmem [#allocation0], 344
    %28 = vst [vmem:[%s27] sm:%s3] %v26
    %s29 = smul.addr 2, 42
    %s30 = scalar_lea.vmem %s0, %s29
    %v31 = vld [vmem:[%s30] sm:%s3]
    %s32 = scalar_lea.vmem [#allocation0], 336
    %33 = vst [vmem:[%s32] sm:%s3] %v31
    %s34 = smul.addr 2, 41
    %s35 = scalar_lea.vmem %s0, %s34
    %v36 = vld [vmem:[%s35] sm:%s3]
    %s37 = scalar_lea.vmem [#allocation0], 328
    %38 = vst [vmem:[%s37] sm:%s3] %v36
    %s39 = smul.addr 2, 40
    %s40 = scalar_lea.vmem %s0, %s39
    %v41 = vld [vmem:[%s40] sm:%s3]
    %s42 = scalar_lea.vmem [#allocation0], 320
    %43 = vst [vmem:[%s42] sm:%s3] %v41
    %s44 = smul.addr 2, 39
    %s45 = scalar_lea.vmem %s0, %s44
    %v46 = vld [vmem:[%s45] sm:%s3]
    %s47 = scalar_lea.vmem [#allocation0], 312
    %48 = vst [vmem:[%s47] sm:%s3] %v46
    %s49 = smul.addr 2, 38
    %s50 = scalar_lea.vmem %s0, %s49
    %v51 = vld [vmem:[%s50] sm:%s3]
    %s52 = scalar_lea.vmem [#allocation0], 304
    %53 = vst [vmem:[%s52] sm:%s3] %v51
    %s54 = smul.addr 2, 37
    %s55 = scalar_lea.vmem %s0, %s54
    %v56 = vld [vmem:[%s55] sm:%s3]
    %s57 = scalar_lea.vmem [#allocation0], 296
    %58 = vst [vmem:[%s57] sm:%s3] %v56
    %s59 = smul.addr 2, 36
    %s60 = scalar_lea.vmem %s0, %s59
    %v61 = vld [vmem:[%s60] sm:%s3]
    %s62 = scalar_lea.vmem [#allocation0], 288
    %63 = vst [vmem:[%s62] sm:%s3] %v61
    %s64 = smul.addr 2, 35
    %s65 = scalar_lea.vmem %s0, %s64
    %v66 = vld [vmem:[%s65] sm:%s3]
    %s67 = scalar_lea.vmem [#allocation0], 280
    %68 = vst [vmem:[%s67] sm:%s3] %v66
    %s69 = smul.addr 2, 34
    %s70 = scalar_lea.vmem %s0, %s69
    %v71 = vld [vmem:[%s70] sm:%s3]
    %s72 = scalar_lea.vmem [#allocation0], 272
    %73 = vst [vmem:[%s72] sm:%s3] %v71
    %s74 = smul.addr 2, 33
    %s75 = scalar_lea.vmem %s0, %s74
    %v76 = vld [vmem:[%s75] sm:%s3]
    %s77 = scalar_lea.vmem [#allocation0], 264
    %78 = vst [vmem:[%s77] sm:%s3] %v76
    %s79 = smul.addr 2, 32
    %s80 = scalar_lea.vmem %s0, %s79
    %v81 = vld [vmem:[%s80] sm:%s3]
    %s82 = scalar_lea.vmem [#allocation0], 256
    %83 = vst [vmem:[%s82] sm:%s3] %v81
    %s84 = smul.addr 2, 31
    %s85 = scalar_lea.vmem %s0, %s84
    %v86 = vld [vmem:[%s85] sm:%s3]
    %s87 = scalar_lea.vmem [#allocation0], 248
    %88 = vst [vmem:[%s87] sm:%s3] %v86
    %s89 = smul.addr 2, 30
    %s90 = scalar_lea.vmem %s0, %s89
    %v91 = vld [vmem:[%s90] sm:%s3]
    %s92 = scalar_lea.vmem [#allocation0], 240
    %93 = vst [vmem:[%s92] sm:%s3] %v91
    %s94 = smul.addr 2, 29
    %s95 = scalar_lea.vmem %s0, %s94
    %v96 = vld [vmem:[%s95] sm:%s3]
    %s97 = scalar_lea.vmem [#allocation0], 232
    %98 = vst [vmem:[%s97] sm:%s3] %v96
    %s99 = smul.addr 2, 28
    %s100 = scalar_lea.vmem %s0, %s99
    %v101 = vld [vmem:[%s100] sm:%s3]
    %s102 = scalar_lea.vmem [#allocation0], 224
    %103 = vst [vmem:[%s102] sm:%s3] %v101
    %s104 = smul.addr 2, 27
    %s105 = scalar_lea.vmem %s0, %s104
    %v106 = vld [vmem:[%s105] sm:%s3]
    %s107 = scalar_lea.vmem [#allocation0], 216
    %108 = vst [vmem:[%s107] sm:%s3] %v106
    %s109 = smul.addr 2, 26
    %s110 = scalar_lea.vmem %s0, %s109
    %v111 = vld [vmem:[%s110] sm:%s3]
    %s112 = scalar_lea.vmem [#allocation0], 208
    %113 = vst [vmem:[%s112] sm:%s3] %v111
    %s114 = smul.addr 2, 25
    %s115 = scalar_lea.vmem %s0, %s114
    %v116 = vld [vmem:[%s115] sm:%s3]
    %s117 = scalar_lea.vmem [#allocation0], 200
    %118 = vst [vmem:[%s117] sm:%s3] %v116
    %s119 = smul.addr 2, 24
    %s120 = scalar_lea.vmem %s0, %s119
    %v121 = vld [vmem:[%s120] sm:%s3]
    %s122 = scalar_lea.vmem [#allocation0], 192
    %123 = vst [vmem:[%s122] sm:%s3] %v121
    %s124 = smul.addr 2, 23
    %s125 = scalar_lea.vmem %s0, %s124
    %v126 = vld [vmem:[%s125] sm:%s3]
    %s127 = scalar_lea.vmem [#allocation0], 184
    %128 = vst [vmem:[%s127] sm:%s3] %v126
    %s129 = smul.addr 2, 22
    %s130 = scalar_lea.vmem %s0, %s129
    %v131 = vld [vmem:[%s130] sm:%s3]
    %s132 = scalar_lea.vmem [#allocation0], 176
    %133 = vst [vmem:[%s132] sm:%s3] %v131
    %s134 = smul.addr 2, 21
    %s135 = scalar_lea.vmem %s0, %s134
    %v136 = vld [vmem:[%s135] sm:%s3]
    %s137 = scalar_lea.vmem [#allocation0], 168
    %138 = vst [vmem:[%s137] sm:%s3] %v136
    %s139 = smul.addr 2, 20
    %s140 = scalar_lea.vmem %s0, %s139
    %v141 = vld [vmem:[%s140] sm:%s3]
    %s142 = scalar_lea.vmem [#allocation0], 160
    %143 = vst [vmem:[%s142] sm:%s3] %v141
    %s144 = smul.addr 2, 19
    %s145 = scalar_lea.vmem %s0, %s144
    %v146 = vld [vmem:[%s145] sm:%s3]
    %s147 = scalar_lea.vmem [#allocation0], 152
    %148 = vst [vmem:[%s147] sm:%s3] %v146
    %s149 = smul.addr 2, 18
    %s150 = scalar_lea.vmem %s0, %s149
    %v151 = vld [vmem:[%s150] sm:%s3]
    %s152 = scalar_lea.vmem [#allocation0], 144
    %153 = vst [vmem:[%s152] sm:%s3] %v151
    %s154 = smul.addr 2, 17
    %s155 = scalar_lea.vmem %s0, %s154
    %v156 = vld [vmem:[%s155] sm:%s3]
    %s157 = scalar_lea.vmem [#allocation0], 136
    %158 = vst [vmem:[%s157] sm:%s3] %v156
    %s159 = smul.addr 2, 16
    %s160 = scalar_lea.vmem %s0, %s159
    %v161 = vld [vmem:[%s160] sm:%s3]
    %s162 = scalar_lea.vmem [#allocation0], 128
    %163 = vst [vmem:[%s162] sm:%s3] %v161
    %s164 = smul.addr 2, 15
    %s165 = scalar_lea.vmem %s0, %s164
    %v166 = vld [vmem:[%s165] sm:%s3]
    %s167 = scalar_lea.vmem [#allocation0], 120
    %168 = vst [vmem:[%s167] sm:%s3] %v166
    %s169 = smul.addr 2, 14
    %s170 = scalar_lea.vmem %s0, %s169
    %v171 = vld [vmem:[%s170] sm:%s3]
    %s172 = scalar_lea.vmem [#allocation0], 112
    %173 = vst [vmem:[%s172] sm:%s3] %v171
    %s174 = smul.addr 2, 13
    %s175 = scalar_lea.vmem %s0, %s174
    %v176 = vld [vmem:[%s175] sm:%s3]
    %s177 = scalar_lea.vmem [#allocation0], 104
    %178 = vst [vmem:[%s177] sm:%s3] %v176
    %s179 = smul.addr 2, 12
    %s180 = scalar_lea.vmem %s0, %s179
    %v181 = vld [vmem:[%s180] sm:%s3]
    %s182 = scalar_lea.vmem [#allocation0], 96
    %183 = vst [vmem:[%s182] sm:%s3] %v181
    %s184 = smul.addr 2, 11
    %s185 = scalar_lea.vmem %s0, %s184
    %v186 = vld [vmem:[%s185] sm:%s3]
    %s187 = scalar_lea.vmem [#allocation0], 88
    %188 = vst [vmem:[%s187] sm:%s3] %v186
    %s189 = smul.addr 2, 10
    %s190 = scalar_lea.vmem %s0, %s189
    %v191 = vld [vmem:[%s190] sm:%s3]
    %s192 = scalar_lea.vmem [#allocation0], 80
    %193 = vst [vmem:[%s192] sm:%s3] %v191
    %s194 = smul.addr 2, 9
    %s195 = scalar_lea.vmem %s0, %s194
    %v196 = vld [vmem:[%s195] sm:%s3]
    %s197 = scalar_lea.vmem [#allocation0], 72
    %198 = vst [vmem:[%s197] sm:%s3] %v196
    %s199 = smul.addr 2, 8
    %s200 = scalar_lea.vmem %s0, %s199
    %v201 = vld [vmem:[%s200] sm:%s3]
    %s202 = scalar_lea.vmem [#allocation0], 64
    %203 = vst [vmem:[%s202] sm:%s3] %v201
    %s204 = smul.addr 2, 7
    %s205 = scalar_lea.vmem %s0, %s204
    %v206 = vld [vmem:[%s205] sm:%s3]
    %s207 = scalar_lea.vmem [#allocation0], 56
    %208 = vst [vmem:[%s207] sm:%s3] %v206
    %s209 = smul.addr 2, 6
    %s210 = scalar_lea.vmem %s0, %s209
    %v211 = vld [vmem:[%s210] sm:%s3]
    %s212 = scalar_lea.vmem [#allocation0], 48
    %213 = vst [vmem:[%s212] sm:%s3] %v211
    %s214 = smul.addr 2, 5
    %s215 = scalar_lea.vmem %s0, %s214
    %v216 = vld [vmem:[%s215] sm:%s3]
    %s217 = scalar_lea.vmem [#allocation0], 40
    %218 = vst [vmem:[%s217] sm:%s3] %v216
    %s219 = smul.addr 2, 4
    %s220 = scalar_lea.vmem %s0, %s219
    %v221 = vld [vmem:[%s220] sm:%s3]
    %s222 = scalar_lea.vmem [#allocation0], 32
    %223 = vst [vmem:[%s222] sm:%s3] %v221
    %s224 = smul.addr 2, 3
    %s225 = scalar_lea.vmem %s0, %s224
    %v226 = vld [vmem:[%s225] sm:%s3]
    %s227 = scalar_lea.vmem [#allocation0], 24
    %228 = vst [vmem:[%s227] sm:%s3] %v226
    %s229 = smul.addr 2, 2
    %s230 = scalar_lea.vmem %s0, %s229
    %v231 = vld [vmem:[%s230] sm:%s3]
    %s232 = scalar_lea.vmem [#allocation0], 16
    %233 = vst [vmem:[%s232] sm:%s3] %v231
    %s234 = scalar_lea.vmem %s0, 2
    %v235 = vld [vmem:[%s234] sm:%s3]
    %s236 = scalar_lea.vmem [#allocation0], 8
    %237 = vst [vmem:[%s236] sm:%s3] %v235
    %v238 = vld [vmem:[%s0] sm:%s3]
    %239 = vst [vmem:[#allocation0] sm:%s3] %v238
    %v240 = vld [vmem:[#allocation0] ss:$8 sm:$0xf]
    %v241 = vld [vmem:[#allocation0] ss:$8 sm:$0xf0]
    %vm242 = vcmask 1047556
    %v243 = vsel %vm242, %v241, %v240
    %vm244 = vcmask 64512
    %245 = vst.msk [vmem:[%s1] sm:$0xff] %vm244, %v243
    %s246 = scalar_lea.vmem [#allocation0], 64
    %v247 = vld [vmem:[%s246] ss:$8 sm:$0xf]
    %s248 = scalar_lea.vmem [#allocation0], 64
    %v249 = vld [vmem:[%s248] ss:$8 sm:$0xf0]
    %vm250 = vcmask 1047556
    %v251 = vsel %vm250, %v249, %v247
    %vm252 = vcmask 64512
    %s253 = scalar_lea.vmem %s1, 8
    %254 = vst.msk [vmem:[%s253] sm:$0xff] %vm252, %v251
    %s255 = scalar_lea.vmem [#allocation0], 128
    %v256 = vld [vmem:[%s255] ss:$8 sm:$0xf]
    %s257 = scalar_lea.vmem [#allocation0], 128
    %v258 = vld [vmem:[%s257] ss:$8 sm:$0xf0]
    %vm259 = vcmask 1047556
    %v260 = vsel %vm259, %v258, %v256
    %vm261 = vcmask 64512
    %s262 = scalar_lea.vmem %s1, 16
    %263 = vst.msk [vmem:[%s262] sm:$0xff] %vm261, %v260
    %s264 = scalar_lea.vmem [#allocation0], 192
    %v265 = vld [vmem:[%s264] ss:$8 sm:$0xf]
    %s266 = scalar_lea.vmem [#allocation0], 192
    %v267 = vld [vmem:[%s266] ss:$8 sm:$0xf0]
    %vm268 = vcmask 1047556
    %v269 = vsel %vm268, %v267, %v265
    %vm270 = vcmask 64512
    %s271 = scalar_lea.vmem %s1, 24
    %272 = vst.msk [vmem:[%s271] sm:$0xff] %vm270, %v269
    %s273 = scalar_lea.vmem [#allocation0], 256
    %v274 = vld [vmem:[%s273] ss:$8 sm:$0xf]
    %s275 = scalar_lea.vmem [#allocation0], 256
    %v276 = vld [vmem:[%s275] ss:$8 sm:$0xf0]
    %vm277 = vcmask 1047556
    %v278 = vsel %vm277, %v276, %v274
    %vm279 = vcmask 64512
    %s280 = scalar_lea.vmem %s1, 32
    %281 = vst.msk [vmem:[%s280] sm:$0xff] %vm279, %v278
    %s282 = scalar_lea.vmem [#allocation0], 320
    %v283 = vld [vmem:[%s282] ss:$8 sm:$0xf]
    %s284 = scalar_lea.vmem [#allocation0], 320
    %v285 = vld [vmem:[%s284] ss:$8 sm:$0xf0]
    %vm286 = vcmask 1047556
    %v287 = vsel %vm286, %v285, %v283
    %vm288 = vcmask 64512
    %s289 = scalar_lea.vmem %s1, 40
    %290 = vst.msk [vmem:[%s289] sm:$0xff] %vm288, %v287
    %s291 = scalar_lea.vmem [#allocation0], 1
    %v292 = vld [vmem:[%s291] ss:$8 sm:$0xf]
    %s293 = scalar_lea.vmem [#allocation0], 1
    %v294 = vld [vmem:[%s293] ss:$8 sm:$0xf0]
    %vm295 = vcmask 1047556
    %v296 = vsel %vm295, %v294, %v292
    %297 = vrot.lane.b32.xlu0 %v296, 8
    %v298 = vpop.permute.xlu0 %297
    %vm299 = vcmask 130112
    %300 = vst.msk [vmem:[%s1] sm:$0xff] %vm299, %v298
    %s301 = scalar_lea.vmem [#allocation0], 257
    %v302 = vld [vmem:[%s301] ss:$8 sm:$0xf]
    %s303 = scalar_lea.vmem [#allocation0], 257
    %v304 = vld [vmem:[%s303] ss:$8 sm:$0xf0]
    %vm305 = vcmask 1047556
    %v306 = vsel %vm305, %v304, %v302
    %307 = vrot.lane.b32.xlu0 %v306, 8
    %v308 = vpop.permute.xlu0 %307
    %vm309 = vcmask 130112
    %s310 = scalar_lea.vmem %s1, 32
    %311 = vst.msk [vmem:[%s310] sm:$0xff] %vm309, %v308
    %s312 = scalar_lea.vmem [#allocation0], 65
    %v313 = vld [vmem:[%s312] ss:$8 sm:$0xf]
    %s314 = scalar_lea.vmem [#allocation0], 65
    %v315 = vld [vmem:[%s314] ss:$8 sm:$0xf0]
    %vm316 = vcmask 1047556
    %v317 = vsel %vm316, %v315, %v313
    %318 = vrot.lane.b32.xlu0 %v317, 8
    %v319 = vpop.permute.xlu0 %318
    %vm320 = vcmask 130112
    %s321 = scalar_lea.vmem %s1, 8
    %322 = vst.msk [vmem:[%s321] sm:$0xff] %vm320, %v319
    %s323 = scalar_lea.vmem [#allocation0], 321
    %v324 = vld [vmem:[%s323] ss:$8 sm:$0xf]
    %s325 = scalar_lea.vmem [#allocation0], 321
    %v326 = vld [vmem:[%s325] ss:$8 sm:$0xf0]
    %vm327 = vcmask 1047556
    %v328 = vsel %vm327, %v326, %v324
    %329 = vrot.lane.b32.xlu0 %v328, 8
    %v330 = vpop.permute.xlu0 %329
    %vm331 = vcmask 130112
    %s332 = scalar_lea.vmem %s1, 40
    %333 = vst.msk [vmem:[%s332] sm:$0xff] %vm331, %v330
    %s334 = scalar_lea.vmem [#allocation0], 129
    %v335 = vld [vmem:[%s334] ss:$8 sm:$0xf]
    %s336 = scalar_lea.vmem [#allocation0], 129
    %v337 = vld [vmem:[%s336] ss:$8 sm:$0xf0]
    %vm338 = vcmask 1047556
    %v339 = vsel %vm338, %v337, %v335
    %340 = vrot.lane.b32.xlu0 %v339, 8
    %v341 = vpop.permute.xlu0 %340
    %vm342 = vcmask 130112
    %s343 = scalar_lea.vmem %s1, 16
    %344 = vst.msk [vmem:[%s343] sm:$0xff] %vm342, %v341
    %s345 = scalar_lea.vmem [#allocation0], 193
    %v346 = vld [vmem:[%s345] ss:$8 sm:$0xf]
    %s347 = scalar_lea.vmem [#allocation0], 193
    %v348 = vld [vmem:[%s347] ss:$8 sm:$0xf0]
    %vm349 = vcmask 1047556
    %v350 = vsel %vm349, %v348, %v346
    %351 = vrot.lane.b32.xlu0 %v350, 8
    %v352 = vpop.permute.xlu0 %351
    %vm353 = vcmask 130112
    %s354 = scalar_lea.vmem %s1, 24
    %355 = vst.msk [vmem:[%s354] sm:$0xff] %vm353, %v352

// kernel: idct_forward.1
$region0: #{idct_forward.1}
  #allocation0 [shape = 'u32[]', space=smem, size = 0x4, offset = 0x4, fixed_abs, tag = 'smem constant byte address 0x4 - core index']
  #allocation1 [shape = 'u32[144,128]{1,0:T(1,128)}', space=vmem, size = 0x12000, scoped, tag = 'internal scratch']
  %s0 = inlined_call_operand.vmem [shape: f32[3,2,16,16], index: 0, kind: input, shape index: {}]
  %s1 = inlined_call_operand.vmem [shape: f32[3,16,16], index: 1, kind: input, shape index: {}]
  %s2 = inlined_call_operand.vmem [shape: f32[16,16], index: 2, kind: input, shape index: {}]
  %s3 = inlined_call_operand.vmem [shape: f32[16,16], index: 3, kind: input, shape index: {}]
  %s4 = inlined_call_operand.hbm [shape: f32[2,3,16,16], index: 4, kind: output, shape index: {}]
  %s5 = sld [smem:[#allocation0]]
  $region87: #{idct_forward.1} parent=0
    _
  %s7 = ssub.s32 1, %s5
  %s8 = scalar_select 0, %s7, %s5
  $region1: #{idct_forward.1} parent=0
    #allocation2 [shape = 'u8[49152]{0}', space=vmem, size = 0xc000, scoped, tag = 'input window, operand 0']
    #allocation3 [shape = 'u8[49152]{0}', space=vmem, size = 0xc000, scoped, tag = 'output window, operand 0']
    #allocation4 [shape = 's32[2]{0}', space=sflag, size = 0x8, scoped, tag = 'scoped memory for idct_forward.1']
    %9 = vsyncpa [#allocation4], 0
    %s10 = scalar_lea.sflag [#allocation4], 1
    %11 = vsyncpa %s10, 0
    loop: start=0, step=1, limit=4
    $region2: #{idct_forward.1} parent=1 // loop_pre_header
      _
    $region3: #{idct_forward.1} parent=1 // loop_header
      %s13 = sphi 0, %s17
      %p14 = scmp.ge.s32.totalorder %s13, 4
      %s20 = sphi 0, %s39
      %s21 = sphi 0, %s35
      %s22 = sphi 0, %s31
      %s23 = sphi 0, %s20
      %s24 = sphi 0, %s21
      %s25 = sphi 0, %s22
      %s26 = sphi 0, %s23
      %s27 = sphi 0, %s24
      %s28 = sphi 0, %s25
      %s46 = sphi 0, %s48
      %s49 = sphi 0, %s46
      %s50 = sphi 0, %s49
      %s66 = sphi 0, %s50
      %s70 = sphi 0, %s70
      %s72 = sphi 0, %s70
      %s73 = sphi 0, %s72
      %s87 = sphi 0, %s73
      %s91 = sphi 0, %s91
      %s93 = sphi 0, %s91
      %s94 = sphi 0, %s93
      %s108 = sphi 0, %s94
      %s112 = sphi 0, %s112
      %s114 = sphi 0, %s112
      %s115 = sphi 0, %s114
      %s129 = sphi 0, %s115
      %s139 = sphi 0, %s141
      %s142 = sphi 0, %s139
      %s143 = sphi 0, %s142
      %s159 = sphi 0, %s143
    $region4: #{idct_forward.1} parent=1 // loop_header_branch
      %16 = sbr.rel (%p14) target = $region8
    $region5: #{idct_forward.1} parent=1 // loop_body
      %s18 = ssub.s32 %s13, 1
      %s19 = ssub.s32 %s13, 2
      %s29 = sadd.s32 1, %s22
      %p30 = scmp.ge.s32.totalorder %s29, 1
      %s31 = scalar_select %p30, 0, %s29
      %s32 = sadd.s32 1, %s21
      %s33 = scalar_select %p30, %s32, %s21
      %p34 = scmp.ge.s32.totalorder %s33, 1
      %s35 = scalar_select %p34, 0, %s33
      %s36 = sadd.s32 1, %s20
      %s37 = scalar_select %p34, %s36, %s20
      %p38 = scmp.ge.s32.totalorder %s37, 2
      %s39 = scalar_select %p38, 0, %s37
      %s40 = ssub.s32 %s20, %s39
      %s41 = ssub.s32 %s21, %s35
      %s42 = sor.u32 %s40, %s41
      %s43 = ssub.s32 %s22, %s31
      %s44 = sor.u32 %s42, %s43
      %p45 = scmp.eq.s32.totalorder %s44, 0
      %s47 = sadd.s32 %s46, 1
      %s48 = scalar_select %p45, %s46, %s47
      %p51 = pneg %p45
      %p52 = scmp.eq.s32.totalorder %s13, 1
      %p53 = por %p51, %p52
      %p54 = scmp.ne.s32.totalorder %s46, %s49
      %p55 = scmp.eq.s32.totalorder %s13, 0
      %p56 = por %p54, %p55
      %p57 = scmp.ne.s32.totalorder %s46, %s49
      %p58 = scmp.eq.s32.totalorder %s18, 1
      %p59 = por %p57, %p58
      %p60 = scmp.ne.s32.totalorder %s49, %s50
      %p61 = scmp.eq.s32.totalorder %s18, 0
      %p62 = por %p60, %p61
      %p63 = scmp.ne.s32.totalorder %s49, %s50
      %p64 = scmp.eq.s32.totalorder %s19, 1
      %p65 = por %p63, %p64
      %p67 = scmp.ne.s32.totalorder %s50, %s66
      %p68 = scmp.eq.s32.totalorder %s19, 0
      %p69 = por %p67, %p68
      %s71 = sadd.s32 %s70, 1
      %p74 = scmp.eq.s32.totalorder %s13, 1
      %p75 = scmp.ne.s32.totalorder %s70, %s72
      %p76 = scmp.eq.s32.totalorder %s13, 0
      %p77 = por %p75, %p76
      %p78 = scmp.ne.s32.totalorder %s70, %s72
      %p79 = scmp.eq.s32.totalorder %s18, 1
      %p80 = por %p78, %p79
      %p81 = scmp.ne.s32.totalorder %s72, %s73
      %p82 = scmp.eq.s32.totalorder %s18, 0
      %p83 = por %p81, %p82
      %p84 = scmp.ne.s32.totalorder %s72, %s73
      %p85 = scmp.eq.s32.totalorder %s19, 1
      %p86 = por %p84, %p85
      %p88 = scmp.ne.s32.totalorder %s73, %s87
      %p89 = scmp.eq.s32.totalorder %s19, 0
      %p90 = por %p88, %p89
      %s92 = sadd.s32 %s91, 1
      %p95 = scmp.eq.s32.totalorder %s13, 1
      %p96 = scmp.ne.s32.totalorder %s91, %s93
      %p97 = scmp.eq.s32.totalorder %s13, 0
      %p98 = por %p96, %p97
      %p99 = scmp.ne.s32.totalorder %s91, %s93
      %p100 = scmp.eq.s32.totalorder %s18, 1
      %p101 = por %p99, %p100
      %p102 = scmp.ne.s32.totalorder %s93, %s94
      %p103 = scmp.eq.s32.totalorder %s18, 0
      %p104 = por %p102, %p103
      %p105 = scmp.ne.s32.totalorder %s93, %s94
      %p106 = scmp.eq.s32.totalorder %s19, 1
      %p107 = por %p105, %p106
      %p109 = scmp.ne.s32.totalorder %s94, %s108
      %p110 = scmp.eq.s32.totalorder %s19, 0
      %p111 = por %p109, %p110
      %s113 = sadd.s32 %s112, 1
      %p116 = scmp.eq.s32.totalorder %s13, 1
      %p117 = scmp.ne.s32.totalorder %s112, %s114
      %p118 = scmp.eq.s32.totalorder %s13, 0
      %p119 = por %p117, %p118
      %p120 = scmp.ne.s32.totalorder %s112, %s114
      %p121 = scmp.eq.s32.totalorder %s18, 1
      %p122 = por %p120, %p121
      %p123 = scmp.ne.s32.totalorder %s114, %s115
      %p124 = scmp.eq.s32.totalorder %s18, 0
      %p125 = por %p123, %p124
      %p126 = scmp.ne.s32.totalorder %s114, %s115
      %p127 = scmp.eq.s32.totalorder %s19, 1
      %p128 = por %p126, %p127
      %p130 = scmp.ne.s32.totalorder %s115, %s129
      %p131 = scmp.eq.s32.totalorder %s19, 0
      %p132 = por %p130, %p131
      %s133 = ssub.s32 %s20, %s39
      %s134 = ssub.s32 %s21, %s35
      %s135 = sor.u32 %s133, %s134
      %s136 = ssub.s32 %s22, %s31
      %s137 = sor.u32 %s135, %s136
      %p138 = scmp.eq.s32.totalorder %s137, 0
      %s140 = sadd.s32 %s139, 1
      %s141 = scalar_select %p138, %s139, %s140
      %p144 = pneg %p138
      %p145 = scmp.eq.s32.totalorder %s13, 1
      %p146 = por %p144, %p145
      %p147 = scmp.ne.s32.totalorder %s139, %s142
      %p148 = scmp.eq.s32.totalorder %s13, 0
      %p149 = por %p147, %p148
      %p150 = scmp.ne.s32.totalorder %s139, %s142
      %p151 = scmp.eq.s32.totalorder %s18, 1
      %p152 = por %p150, %p151
      %p153 = scmp.ne.s32.totalorder %s142, %s143
      %p154 = scmp.eq.s32.totalorder %s18, 0
      %p155 = por %p153, %p154
      %p156 = scmp.ne.s32.totalorder %s142, %s143
      %p157 = scmp.eq.s32.totalorder %s19, 1
      %p158 = por %p156, %p157
      %p160 = scmp.ne.s32.totalorder %s143, %s159
      %p161 = scmp.eq.s32.totalorder %s19, 0
      %p162 = por %p160, %p161
      %p163 = scmp.le.s32.totalorder 1, %s13
      %p164 = scmp.lt.s32.totalorder %s13, 3
      %p165 = pnand %p163, %p164
      %p166 = pneg %p165
      // Predicated region
      $region9: #{idct_forward.1} parent=5 // pred_check
        _
      $region10: #{idct_forward.1} parent=5 // pred_check_branch
        %168 = sbr.rel (%p165) target = $region12
      $region11: #{idct_forward.1} parent=5 // pred_region
        %s169 = ssub.s32 %s13, 1
        // Predicated region
        $region13: #{idct_forward.1} parent=11 // pred_check
          %p170 = pneg %p83
        $region14: #{idct_forward.1} parent=11 // pred_check_branch
          %172 = sbr.rel (%p170) target = $region16
        $region15: #{idct_forward.1} parent=11 // pred_region
          _
        $region16: #{idct_forward.1} parent=11 // pred_fallthru
          _
        // Predicated region
        $region17: #{idct_forward.1} parent=11 // pred_check
          %p173 = pneg %p104
        $region18: #{idct_forward.1} parent=11 // pred_check_branch
          %175 = sbr.rel (%p173) target = $region20
        $region19: #{idct_forward.1} parent=11 // pred_region
          _
        $region20: #{idct_forward.1} parent=11 // pred_fallthru
          _
        // Predicated region
        $region21: #{idct_forward.1} parent=11 // pred_check
          %p176 = pneg %p125
        $region22: #{idct_forward.1} parent=11 // pred_check_branch
          %178 = sbr.rel (%p176) target = $region24
        $region23: #{idct_forward.1} parent=11 // pred_region
          _
        $region24: #{idct_forward.1} parent=11 // pred_fallthru
          _
      $region12: #{idct_forward.1} parent=5 // pred_fallthru
        _
      %p179 = scmp.lt.s32.totalorder %s13, 2
      // Predicated region
      $region25: #{idct_forward.1} parent=5 // pred_check
        %p180 = pneg %p179
      $region26: #{idct_forward.1} parent=5 // pred_check_branch
        %182 = sbr.rel (%p180) target = $region28
      $region27: #{idct_forward.1} parent=5 // pred_region
        // Predicated region
        $region29: #{idct_forward.1} parent=27 // pred_check
          %p183 = pneg %p56
        $region30: #{idct_forward.1} parent=27 // pred_check_branch
          %185 = sbr.rel (%p183) target = $region32
        $region31: #{idct_forward.1} parent=27 // pred_region
          %s186 = sand.u32 %s46, 1
          %s187 = sand.u32 %s46, 1
          %s188 = smul.addr %s187, 48
          %s189 = scalar_lea.vmem [#allocation2], %s188
          %s190 = smul.u32 2, %s21
          %s191 = sadd.s32 %s22, %s190
          %s192 = smul.addr %s20, 2
          %s193 = sadd.s32 %s191, %s192
          %s194 = smul.addr %s193, 8
          %s195 = scalar_lea.vmem %s0, %s194
          // Predicated region
          $region33: #{idct_forward.1} parent=31 // pred_check
            _
          $region34: #{idct_forward.1} parent=31 // pred_check_branch
            %197 = sbr.rel (0) target = $region36
          $region35: #{idct_forward.1} parent=31 // pred_region
            // Predicated region
            $region37: #{idct_forward.1} parent=35 // pred_check
              _
            $region38: #{idct_forward.1} parent=35 // pred_check_branch
              %199 = sbr.rel (0) target = $region40
            $region39: #{idct_forward.1} parent=35 // pred_region
              // Predicated region
              $region52: #{idct_forward.1} parent=39 // pred_check
                _
              $region53: #{idct_forward.1} parent=39 // pred_check_branch
                %224 = sbr.rel (0) target = $region55
              $region54: #{idct_forward.1} parent=39 // pred_region
                loop: start=0, step=1, limit=1
                $region56: #{idct_forward.1} parent=54 // loop_pre_header
                  _
                $region57: #{idct_forward.1} parent=54 // loop_header
                  %s226 = sphi 0, %s230
                  %p227 = scmp.ge.s32.totalorder %s226, 1
                  %s231 = sphi %s195, %s195
                  %s232 = sphi %s189, %s189
                $region58: #{idct_forward.1} parent=54 // loop_header_branch
                  %229 = sbr.rel (%p227) target = $region62
                $region59: #{idct_forward.1} parent=54 // loop_body
                  %v233 = vld [vmem:[%s231] sm:$0xff]
                  %234 = vst [vmem:[%s232] sm:$0xff] %v233
                  %v235 = vld [vmem:[%s231 + $0x8] sm:$0xff]
                  %236 = vst [vmem:[%s232 + $0x8] sm:$0xff] %v235
                  %v237 = vld [vmem:[%s231 + $0x20] sm:$0xff]
                  %238 = vst [vmem:[%s232 + $0x10] sm:$0xff] %v237
                  %v239 = vld [vmem:[%s231 + $0x28] sm:$0xff]
                  %240 = vst [vmem:[%s232 + $0x18] sm:$0xff] %v239
                  %v241 = vld [vmem:[%s231 + $0x40] sm:$0xff]
                  %242 = vst [vmem:[%s232 + $0x20] sm:$0xff] %v241
                  %v243 = vld [vmem:[%s231 + $0x48] sm:$0xff]
                  %244 = vst [vmem:[%s232 + $0x28] sm:$0xff] %v243
                $region60: #{idct_forward.1} parent=54 // loop_footer
                  %s230 = sadd.s32 1, %s226
                $region61: #{idct_forward.1} parent=54 // loop_footer_branch
                  %225 = sbr.rel target = $region57
                $region62: #{idct_forward.1} parent=54 // loop_exit
                  _
              $region55: #{idct_forward.1} parent=39 // pred_fallthru
                _
              // Predicated region
              $region63: #{idct_forward.1} parent=39 // pred_check
                _
              $region64: #{idct_forward.1} parent=39 // pred_check_branch
                %246 = sbr.rel target = $region66
              $region65: #{idct_forward.1} parent=39 // pred_region
                _
              $region66: #{idct_forward.1} parent=39 // pred_fallthru
                _
            $region40: #{idct_forward.1} parent=35 // pred_fallthru
              _
            // Predicated region
            $region41: #{idct_forward.1} parent=35 // pred_check
              _
            $region42: #{idct_forward.1} parent=35 // pred_check_branch
              %201 = sbr.rel target = $region44
            $region43: #{idct_forward.1} parent=35 // pred_region
              loop: start=0, step=1, limit=1
              $region45: #{idct_forward.1} parent=43 // loop_pre_header
                _
              $region46: #{idct_forward.1} parent=43 // loop_header
                %s204 = sphi 0, %s208
                %p205 = scmp.ge.s32.totalorder %s204, 1
                %s209 = sphi %s195, %s195
                %s210 = sphi %s189, %s189
              $region47: #{idct_forward.1} parent=43 // loop_header_branch
                %207 = sbr.rel (%p205) target = $region51
              $region48: #{idct_forward.1} parent=43 // loop_body
                %v211 = vld [vmem:[%s209] sm:$0xff]
                %212 = vst [vmem:[%s210] sm:$0xff] %v211
                %v213 = vld [vmem:[%s209 + $0x8] sm:$0xff]
                %214 = vst [vmem:[%s210 + $0x8] sm:$0xff] %v213
                %v215 = vld [vmem:[%s209 + $0x20] sm:$0xff]
                %216 = vst [vmem:[%s210 + $0x10] sm:$0xff] %v215
                %v217 = vld [vmem:[%s209 + $0x28] sm:$0xff]
                %218 = vst [vmem:[%s210 + $0x18] sm:$0xff] %v217
                %v219 = vld [vmem:[%s209 + $0x40] sm:$0xff]
                %220 = vst [vmem:[%s210 + $0x20] sm:$0xff] %v219
                %v221 = vld [vmem:[%s209 + $0x48] sm:$0xff]
                %222 = vst [vmem:[%s210 + $0x28] sm:$0xff] %v221
              $region49: #{idct_forward.1} parent=43 // loop_footer
                %s208 = sadd.s32 1, %s204
              $region50: #{idct_forward.1} parent=43 // loop_footer_branch
                %203 = sbr.rel target = $region46
              $region51: #{idct_forward.1} parent=43 // loop_exit
                _
            $region44: #{idct_forward.1} parent=35 // pred_fallthru
              _
          $region36: #{idct_forward.1} parent=31 // pred_fallthru
            _
          %247 = vnop
        $region32: #{idct_forward.1} parent=27 // pred_fallthru
          _
      $region28: #{idct_forward.1} parent=5 // pred_fallthru
        _
      %p248 = scmp.le.s32.totalorder 1, %s13
      %p249 = scmp.lt.s32.totalorder %s13, 3
      %p250 = pnand %p248, %p249
      %p251 = pneg %p250
      // Predicated region
      $region67: #{idct_forward.1} parent=5 // pred_check
        _
      $region68: #{idct_forward.1} parent=5 // pred_check_branch
        %253 = sbr.rel (%p250) target = $region70
      $region69: #{idct_forward.1} parent=5 // pred_region
        %s254 = ssub.s32 %s13, 1
        %s255 = sand.u32 %s49, 1
        %s256 = sand.u32 %s49, 1
        %s257 = smul.addr %s256, 48
        %s258 = scalar_lea.vmem [#allocation2], %s257
        // Predicated region
        $region71: #{idct_forward.1} parent=69 // pred_check
          %p259 = pneg %p62
        $region72: #{idct_forward.1} parent=69 // pred_check_branch
          %261 = sbr.rel (%p259) target = $region74
        $region73: #{idct_forward.1} parent=69 // pred_region
          _
        $region74: #{idct_forward.1} parent=69 // pred_fallthru
          _
        %s262 = sand.u32 %s49, 1
        %s263 = sand.u32 %s49, 1
        %s264 = smul.addr %s263, 48
        %s265 = scalar_lea.vmem [#allocation2], %s264
        %p266 = pneg %p62
        %p267 = pneg %p59
        %p268 = pneg %p83
        %p269 = pneg %p80
        %p270 = pneg %p104
        %p271 = pneg %p101
        %p272 = pneg %p125
        %p273 = pneg %p122
        %p274 = pneg %p155
        %p275 = pneg %p152
        %s276 = sand.u32 %s142, 1
        %s277 = scalar_lea.sflag [#allocation4], %s276
        %s278 = sand.u32 %s142, 1
        %s279 = smul.addr %s278, 48
        %s280 = scalar_lea.vmem [#allocation3], %s279
        %s281 = smul.u32 2, %s24
        %s282 = smul.u32 2, %s24
        %v283 = vld [vmem:[%s2] sm:$0xff]
        %v284 = vld [vmem:[%s2 + $0x8] sm:$0xff]
        %v285 = vld [vmem:[%s3] sm:$0xff]
        %v286 = vld [vmem:[%s3 + $0x8] sm:$0xff]
        %v287 = vld [vmem:[%s258] sm:$0xff]
        %v288 = vld [vmem:[%s258 + $0x8] sm:$0xff]
        %v289 = vld [vmem:[%s1] sm:$0xff]
        %v290 = vld [vmem:[%s1 + $0x8] sm:$0xff]
        %v291 = vmul.f32 %v287, %v289
        %v292 = vmul.f32 %v288, %v290
        %vm293 = vcmask 130048
        %v295 = vsel %vm293, %v283, 0
        %v298 = vsel %vm293, %v284, 0
        %300 = vmatprep.subr.mxu0 0.0
        %301 = vmatpush1.msra.mxu0 %v291
        %302 = vmatprep.subr.mxu0 0.0
        %303 = vmatpush1.msra.mxu0 %v292
        %304 = vmatprep.subr.mxu0 0.0
        %305 = vmatpush1.msra.mxu0 0.0
        %306 = vmatprep.subr.mxu0 0.0
        %307 = vmatpush1.msra.mxu0 0.0
        %308 = vmatprep.subr.mxu0 0.0
        %309 = vmatpush1.msra.mxu0 0.0
        %310 = vmatprep.subr.mxu0 0.0
        %311 = vmatpush1.msra.mxu0 0.0
        %312 = vmatprep.subr.mxu0 0.0
        %313 = vmatpush1.msra.mxu0 0.0
        %314 = vmatprep.subr.mxu0 0.0
        %315 = vmatpush1.msra.mxu0 0.0
        %316 = vmatprep.subr.mxu0 0.0
        %317 = vmatpush1.msra.mxu0 0.0
        %318 = vmatprep.subr.mxu0 0.0
        %319 = vmatpush1.msra.mxu0 0.0
        %320 = vmatprep.subr.mxu0 0.0
        %321 = vmatpush1.msra.mxu0 0.0
        %322 = vmatprep.subr.mxu0 0.0
        %323 = vmatpush1.msra.mxu0 0.0
        %324 = vmatprep.subr.mxu0 0.0
        %325 = vmatpush1.msra.mxu0 0.0
        %326 = vmatprep.subr.mxu0 0.0
        %327 = vmatpush1.msra.mxu0 0.0
        %328 = vmatprep.subr.mxu0 0.0
        %329 = vmatpush1.msra.mxu0 0.0
        %330 = vmatprep.subr.mxu0 0.0
        %331 = vmatpush1.msra.mxu0 0.0
        %332 = vmatprep.subr.mxu0 0.0
        %333 = vmatpush1.msra.mxu0 0.0
        %334 = vmatprep.subr.mxu0 0.0
        %335 = vmatpush1.msra.mxu0 0.0
        %336 = vmatprep.subr.mxu0 0.0
        %337 = vmatpush1.msra.mxu0 0.0
        %338 = vmatprep.subr.mxu0 0.0
        %339 = vmatpush1.msra.mxu0 0.0
        %340 = vmatprep.subr.mxu0 0.0
        %341 = vmatpush1.msra.mxu0 0.0
        %342 = vmatprep.subr.mxu0 0.0
        %343 = vmatpush1.msra.mxu0 0.0
        %344 = vmatprep.subr.mxu0 0.0
        %345 = vmatpush1.msra.mxu0 0.0
        %346 = vmatprep.subr.mxu0 0.0
        %347 = vmatpush1.msra.mxu0 0.0
        %348 = vmatprep.subr.mxu0 0.0
        %349 = vmatpush1.msra.mxu0 0.0
        %350 = vmatprep.subr.mxu0 0.0
        %351 = vmatpush1.msra.mxu0 0.0
        %352 = vmatprep.subr.mxu0 0.0
        %353 = vmatpush1.msra.mxu0 0.0
        %354 = vmatprep.subr.mxu0 0.0
        %355 = vmatpush1.msra.mxu0 0.0
        %356 = vmatprep.subr.mxu0 0.0
        %357 = vmatpush1.msra.mxu0 0.0
        %358 = vmatprep.subr.mxu0 0.0
        %359 = vmatpush1.msra.mxu0 0.0
        %360 = vmatprep.subr.mxu0 0.0
        %361 = vmatpush1.msra.mxu0 0.0
        %362 = vmatprep.subr.mxu0 0.0
        %363 = vmatpush1.msra.mxu0 0.0
        %364 = vmatprep.mubr.f32.mxu0 0.0
        %365 = vmatmul.mubr.f32.gmra.mrb[0].mxu0 %v295
        %v366 = vpop.f32.mrb[0].mxu0
        %v367 = vadd.f32 0.0, %v366
        %v368 = vpop.f32.mrb[0].mxu0
        %369 = vmatprep.mubr.f32.mxu0 0.0
        %370 = vmatmul.mubr.f32.gmra.mrb[0].mxu0 %v298
        %v371 = vpop.f32.mrb[0].mxu0
        %v372 = vadd.f32 0.0, %v371
        %v373 = vpop.f32.mrb[0].mxu0
        %374 = vdwg.mxu0
        %s375 = scalar_lea.vmem %s258, 16 [#allocation2]
        %v376 = vld [vmem:[%s375] sm:$0xff]
        %v377 = vld [vmem:[%s375 + $0x8] sm:$0xff]
        %s378 = scalar_lea.vmem %s1, 16
        %v379 = vld [vmem:[%s378] sm:$0xff]
        %v380 = vld [vmem:[%s378 + $0x8] sm:$0xff]
        %v381 = vmul.f32 %v376, %v379
        %v382 = vmul.f32 %v377, %v380
        %383 = vmatprep.subr.mxu0 0.0
        %384 = vmatpush1.msra.mxu0 %v381
        %385 = vmatprep.subr.mxu0 0.0
        %386 = vmatpush1.msra.mxu0 %v382
        %387 = vmatprep.subr.mxu0 0.0
        %388 = vmatpush1.msra.mxu0 0.0
        %389 = vmatprep.subr.mxu0 0.0
        %390 = vmatpush1.msra.mxu0 0.0
        %391 = vmatprep.subr.mxu0 0.0
        %392 = vmatpush1.msra.mxu0 0.0
        %393 = vmatprep.subr.mxu0 0.0
        %394 = vmatpush1.msra.mxu0 0.0
        %395 = vmatprep.subr.mxu0 0.0
        %396 = vmatpush1.msra.mxu0 0.0
        %397 = vmatprep.subr.mxu0 0.0
        %398 = vmatpush1.msra.mxu0 0.0
        %399 = vmatprep.subr.mxu0 0.0
        %400 = vmatpush1.msra.mxu0 0.0
        %401 = vmatprep.subr.mxu0 0.0
        %402 = vmatpush1.msra.mxu0 0.0
        %403 = vmatprep.subr.mxu0 0.0
        %404 = vmatpush1.msra.mxu0 0.0
        %405 = vmatprep.subr.mxu0 0.0
        %406 = vmatpush1.msra.mxu0 0.0
        %407 = vmatprep.subr.mxu0 0.0
        %408 = vmatpush1.msra.mxu0 0.0
        %409 = vmatprep.subr.mxu0 0.0
        %410 = vmatpush1.msra.mxu0 0.0
        %411 = vmatprep.subr.mxu0 0.0
        %412 = vmatpush1.msra.mxu0 0.0
        %413 = vmatprep.subr.mxu0 0.0
        %414 = vmatpush1.msra.mxu0 0.0
        %415 = vmatprep.subr.mxu0 0.0
        %416 = vmatpush1.msra.mxu0 0.0
        %417 = vmatprep.subr.mxu0 0.0
        %418 = vmatpush1.msra.mxu0 0.0
        %419 = vmatprep.subr.mxu0 0.0
        %420 = vmatpush1.msra.mxu0 0.0
        %421 = vmatprep.subr.mxu0 0.0
        %422 = vmatpush1.msra.mxu0 0.0
        %423 = vmatprep.subr.mxu0 0.0
        %424 = vmatpush1.msra.mxu0 0.0
        %425 = vmatprep.subr.mxu0 0.0
        %426 = vmatpush1.msra.mxu0 0.0
        %427 = vmatprep.subr.mxu0 0.0
        %428 = vmatpush1.msra.mxu0 0.0
        %429 = vmatprep.subr.mxu0 0.0
        %430 = vmatpush1.msra.mxu0 0.0
        %431 = vmatprep.subr.mxu0 0.0
        %432 = vmatpush1.msra.mxu0 0.0
        %433 = vmatprep.subr.mxu0 0.0
        %434 = vmatpush1.msra.mxu0 0.0
        %435 = vmatprep.subr.mxu0 0.0
        %436 = vmatpush1.msra.mxu0 0.0
        %437 = vmatprep.subr.mxu0 0.0
        %438 = vmatpush1.msra.mxu0 0.0
        %439 = vmatprep.subr.mxu0 0.0
        %440 = vmatpush1.msra.mxu0 0.0
        %441 = vmatprep.subr.mxu0 0.0
        %442 = vmatpush1.msra.mxu0 0.0
        %443 = vmatprep.subr.mxu0 0.0
        %444 = vmatpush1.msra.mxu0 0.0
        %445 = vmatprep.subr.mxu0 0.0
        %446 = vmatpush1.msra.mxu0 0.0
        %447 = vmatprep.mubr.f32.mxu0 0.0
        %448 = vmatmul.mubr.f32.gmra.mrb[0].mxu0 %v295
        %v449 = vpop.f32.mrb[0].mxu0
        %v450 = vadd.f32 0.0, %v449
        %v451 = vpop.f32.mrb[0].mxu0
        %452 = vmatprep.mubr.f32.mxu0 0.0
        %453 = vmatmul.mubr.f32.gmra.mrb[0].mxu0 %v298
        %v454 = vpop.f32.mrb[0].mxu0
        %v455 = vadd.f32 0.0, %v454
        %v456 = vpop.f32.mrb[0].mxu0
        %457 = vdwg.mxu0
        %s458 = scalar_lea.vmem %s258, 32 [#allocation2]
        %v459 = vld [vmem:[%s458] sm:$0xff]
        %v460 = vld [vmem:[%s458 + $0x8] sm:$0xff]
        %s461 = scalar_lea.vmem %s1, 32
        %v462 = vld [vmem:[%s461] sm:$0xff]
        %v463 = vld [vmem:[%s461 + $0x8] sm:$0xff]
        %v464 = vmul.f32 %v459, %v462
        %v465 = vmul.f32 %v460, %v463
        %466 = vmatprep.subr.mxu0 0.0
        %467 = vmatpush1.msra.mxu0 %v464
        %468 = vmatprep.subr.mxu0 0.0
        %469 = vmatpush1.msra.mxu0 %v465
        %470 = vmatprep.subr.mxu0 0.0
        %471 = vmatpush1.msra.mxu0 0.0
        %472 = vmatprep.subr.mxu0 0.0
        %473 = vmatpush1.msra.mxu0 0.0
        %474 = vmatprep.subr.mxu0 0.0
        %475 = vmatpush1.msra.mxu0 0.0
        %476 = vmatprep.subr.mxu0 0.0
        %477 = vmatpush1.msra.mxu0 0.0
        %478 = vmatprep.subr.mxu0 0.0
        %479 = vmatpush1.msra.mxu0 0.0
        %480 = vmatprep.subr.mxu0 0.0
        %481 = vmatpush1.msra.mxu0 0.0
        %482 = vmatprep.subr.mxu0 0.0
        %483 = vmatpush1.msra.mxu0 0.0
        %484 = vmatprep.subr.mxu0 0.0
        %485 = vmatpush1.msra.mxu0 0.0
        %486 = vmatprep.subr.mxu0 0.0
        %487 = vmatpush1.msra.mxu0 0.0
        %488 = vmatprep.subr.mxu0 0.0
        %489 = vmatpush1.msra.mxu0 0.0
        %490 = vmatprep.subr.mxu0 0.0
        %491 = vmatpush1.msra.mxu0 0.0
        %492 = vmatprep.subr.mxu0 0.0
        %493 = vmatpush1.msra.mxu0 0.0
        %494 = vmatprep.subr.mxu0 0.0
        %495 = vmatpush1.msra.mxu0 0.0
        %496 = vmatprep.subr.mxu0 0.0
        %497 = vmatpush1.msra.mxu0 0.0
        %498 = vmatprep.subr.mxu0 0.0
        %499 = vmatpush1.msra.mxu0 0.0
        %500 = vmatprep.subr.mxu0 0.0
        %501 = vmatpush1.msra.mxu0 0.0
        %502 = vmatprep.subr.mxu0 0.0
        %503 = vmatpush1.msra.mxu0 0.0
        %504 = vmatprep.subr.mxu0 0.0
        %505 = vmatpush1.msra.mxu0 0.0
        %506 = vmatprep.subr.mxu0 0.0
        %507 = vmatpush1.msra.mxu0 0.0
        %508 = vmatprep.subr.mxu0 0.0
        %509 = vmatpush1.msra.mxu0 0.0
        %510 = vmatprep.subr.mxu0 0.0
        %511 = vmatpush1.msra.mxu0 0.0
        %512 = vmatprep.subr.mxu0 0.0
        %513 = vmatpush1.msra.mxu0 0.0
        %514 = vmatprep.subr.mxu0 0.0
        %515 = vmatpush1.msra.mxu0 0.0
        %516 = vmatprep.subr.mxu0 0.0
        %517 = vmatpush1.msra.mxu0 0.0
        %518 = vmatprep.subr.mxu0 0.0
        %519 = vmatpush1.msra.mxu0 0.0
        %520 = vmatprep.subr.mxu0 0.0
        %521 = vmatpush1.msra.mxu0 0.0
        %522 = vmatprep.subr.mxu0 0.0
        %523 = vmatpush1.msra.mxu0 0.0
        %524 = vmatprep.subr.mxu0 0.0
        %525 = vmatpush1.msra.mxu0 0.0
        %526 = vmatprep.subr.mxu0 0.0
        %527 = vmatpush1.msra.mxu0 0.0
        %528 = vmatprep.subr.mxu0 0.0
        %529 = vmatpush1.msra.mxu0 0.0
        %530 = vmatprep.mubr.f32.mxu0 0.0
        %531 = vmatmul.mubr.f32.gmra.mrb[0].mxu0 %v295
        %v532 = vpop.f32.mrb[0].mxu0
        %v533 = vadd.f32 0.0, %v532
        %v534 = vpop.f32.mrb[0].mxu0
        %535 = vmatprep.mubr.f32.mxu0 0.0
        %536 = vmatmul.mubr.f32.gmra.mrb[0].mxu0 %v298
        %v537 = vpop.f32.mrb[0].mxu0
        %v538 = vadd.f32 0.0, %v537
        %v539 = vpop.f32.mrb[0].mxu0
        %540 = vdwg.mxu0
        %v542 = vsel %vm293, %v367, 0
        %v545 = vsel %vm293, %v372, 0
        %547 = vmatprep.subr.mxu0 0.0
        %548 = vmatpush1.msra.mxu0 %v285
        %549 = vmatprep.subr.mxu0 0.0
        %550 = vmatpush1.msra.mxu0 %v286
        %551 = vmatprep.subr.mxu0 0.0
        %552 = vmatpush1.msra.mxu0 0.0
        %553 = vmatprep.subr.mxu0 0.0
        %554 = vmatpush1.msra.mxu0 0.0
        %555 = vmatprep.subr.mxu0 0.0
        %556 = vmatpush1.msra.mxu0 0.0
        %557 = vmatprep.subr.mxu0 0.0
        %558 = vmatpush1.msra.mxu0 0.0
        %559 = vmatprep.subr.mxu0 0.0
        %560 = vmatpush1.msra.mxu0 0.0
        %561 = vmatprep.subr.mxu0 0.0
        %562 = vmatpush1.msra.mxu0 0.0
        %563 = vmatprep.subr.mxu0 0.0
        %564 = vmatpush1.msra.mxu0 0.0
        %565 = vmatprep.subr.mxu0 0.0
        %566 = vmatpush1.msra.mxu0 0.0
        %567 = vmatprep.subr.mxu0 0.0
        %568 = vmatpush1.msra.mxu0 0.0
        %569 = vmatprep.subr.mxu0 0.0
        %570 = vmatpush1.msra.mxu0 0.0
        %571 = vmatprep.subr.mxu0 0.0
        %572 = vmatpush1.msra.mxu0 0.0
        %573 = vmatprep.subr.mxu0 0.0
        %574 = vmatpush1.msra.mxu0 0.0
        %575 = vmatprep.subr.mxu0 0.0
        %576 = vmatpush1.msra.mxu0 0.0
        %577 = vmatprep.subr.mxu0 0.0
        %578 = vmatpush1.msra.mxu0 0.0
        %579 = vmatprep.subr.mxu0 0.0
        %580 = vmatpush1.msra.mxu0 0.0
        %581 = vmatprep.subr.mxu0 0.0
        %582 = vmatpush1.msra.mxu0 0.0
        %583 = vmatprep.subr.mxu0 0.0
        %584 = vmatpush1.msra.mxu0 0.0
        %585 = vmatprep.subr.mxu0 0.0
        %586 = vmatpush1.msra.mxu0 0.0
        %587 = vmatprep.subr.mxu0 0.0
        %588 = vmatpush1.msra.mxu0 0.0
        %589 = vmatprep.subr.mxu0 0.0
        %590 = vmatpush1.msra.mxu0 0.0
        %591 = vmatprep.subr.mxu0 0.0
        %592 = vmatpush1.msra.mxu0 0.0
        %593 = vmatprep.subr.mxu0 0.0
        %594 = vmatpush1.msra.mxu0 0.0
        %595 = vmatprep.subr.mxu0 0.0
        %596 = vmatpush1.msra.mxu0 0.0
        %597 = vmatprep.subr.mxu0 0.0
        %598 = vmatpush1.msra.mxu0 0.0
        %599 = vmatprep.subr.mxu0 0.0
        %600 = vmatpush1.msra.mxu0 0.0
        %601 = vmatprep.subr.mxu0 0.0
        %602 = vmatpush1.msra.mxu0 0.0
        %603 = vmatprep.subr.mxu0 0.0
        %604 = vmatpush1.msra.mxu0 0.0
        %605 = vmatprep.subr.mxu0 0.0
        %606 = vmatpush1.msra.mxu0 0.0
        %607 = vmatprep.subr.mxu0 0.0
        %608 = vmatpush1.msra.mxu0 0.0
        %609 = vmatprep.subr.mxu0 0.0
        %610 = vmatpush1.msra.mxu0 0.0
        %611 = vmatprep.mubr.f32.mxu0 0.0
        %612 = vmatmul.mubr.f32.gmra.mrb[0].mxu0 %v542
        %v613 = vpop.f32.mrb[0].mxu0
        %v614 = vadd.f32 128.0, %v613
        %v615 = vpop.f32.mrb[0].mxu0
        %616 = vmatprep.mubr.f32.mxu0 0.0
        %617 = vmatmul.mubr.f32.gmra.mrb[0].mxu0 %v545
        %v618 = vpop.f32.mrb[0].mxu0
        %v619 = vadd.f32 128.0, %v618
        %v620 = vpop.f32.mrb[0].mxu0
        %621 = vdwg.mxu0
        %v623 = vsel %vm293, %v450, 0
        %v626 = vsel %vm293, %v455, 0
        %628 = vmatprep.subr.mxu0 0.0
        %629 = vmatpush1.msra.mxu0 %v285
        %630 = vmatprep.subr.mxu0 0.0
        %631 = vmatpush1.msra.mxu0 %v286
        %632 = vmatprep.subr.mxu0 0.0
        %633 = vmatpush1.msra.mxu0 0.0
        %634 = vmatprep.subr.mxu0 0.0
        %635 = vmatpush1.msra.mxu0 0.0
        %636 = vmatprep.subr.mxu0 0.0
        %637 = vmatpush1.msra.mxu0 0.0
        %638 = vmatprep.subr.mxu0 0.0
        %639 = vmatpush1.msra.mxu0 0.0
        %640 = vmatprep.subr.mxu0 0.0
        %641 = vmatpush1.msra.mxu0 0.0
        %642 = vmatprep.subr.mxu0 0.0
        %643 = vmatpush1.msra.mxu0 0.0
        %644 = vmatprep.subr.mxu0 0.0
        %645 = vmatpush1.msra.mxu0 0.0
        %646 = vmatprep.subr.mxu0 0.0
        %647 = vmatpush1.msra.mxu0 0.0
        %648 = vmatprep.subr.mxu0 0.0
        %649 = vmatpush1.msra.mxu0 0.0
        %650 = vmatprep.subr.mxu0 0.0
        %651 = vmatpush1.msra.mxu0 0.0
        %652 = vmatprep.subr.mxu0 0.0
        %653 = vmatpush1.msra.mxu0 0.0
        %654 = vmatprep.subr.mxu0 0.0
        %655 = vmatpush1.msra.mxu0 0.0
        %656 = vmatprep.subr.mxu0 0.0
        %657 = vmatpush1.msra.mxu0 0.0
        %658 = vmatprep.subr.mxu0 0.0
        %659 = vmatpush1.msra.mxu0 0.0
        %660 = vmatprep.subr.mxu0 0.0
        %661 = vmatpush1.msra.mxu0 0.0
        %662 = vmatprep.subr.mxu0 0.0
        %663 = vmatpush1.msra.mxu0 0.0
        %664 = vmatprep.subr.mxu0 0.0
        %665 = vmatpush1.msra.mxu0 0.0
        %666 = vmatprep.subr.mxu0 0.0
        %667 = vmatpush1.msra.mxu0 0.0
        %668 = vmatprep.subr.mxu0 0.0
        %669 = vmatpush1.msra.mxu0 0.0
        %670 = vmatprep.subr.mxu0 0.0
        %671 = vmatpush1.msra.mxu0 0.0
        %672 = vmatprep.subr.mxu0 0.0
        %673 = vmatpush1.msra.mxu0 0.0
        %674 = vmatprep.subr.mxu0 0.0
        %675 = vmatpush1.msra.mxu0 0.0
        %676 = vmatprep.subr.mxu0 0.0
        %677 = vmatpush1.msra.mxu0 0.0
        %678 = vmatprep.subr.mxu0 0.0
        %679 = vmatpush1.msra.mxu0 0.0
        %680 = vmatprep.subr.mxu0 0.0
        %681 = vmatpush1.msra.mxu0 0.0
        %682 = vmatprep.subr.mxu0 0.0
        %683 = vmatpush1.msra.mxu0 0.0
        %684 = vmatprep.subr.mxu0 0.0
        %685 = vmatpush1.msra.mxu0 0.0
        %686 = vmatprep.subr.mxu0 0.0
        %687 = vmatpush1.msra.mxu0 0.0
        %688 = vmatprep.subr.mxu0 0.0
        %689 = vmatpush1.msra.mxu0 0.0
        %690 = vmatprep.subr.mxu0 0.0
        %691 = vmatpush1.msra.mxu0 0.0
        %692 = vmatprep.mubr.f32.mxu0 0.0
        %693 = vmatmul.mubr.f32.gmra.mrb[0].mxu0 %v623
        %v694 = vpop.f32.mrb[0].mxu0
        %v695 = vadd.f32 0.0, %v694
        %v696 = vpop.f32.mrb[0].mxu0
        %697 = vmatprep.mubr.f32.mxu0 0.0
        %698 = vmatmul.mubr.f32.gmra.mrb[0].mxu0 %v626
        %v699 = vpop.f32.mrb[0].mxu0
        %v700 = vadd.f32 0.0, %v699
        %v701 = vpop.f32.mrb[0].mxu0
        %702 = vdwg.mxu0
        %v704 = vsel %vm293, %v533, 0
        %v707 = vsel %vm293, %v538, 0
        %709 = vmatprep.subr.mxu0 0.0
        %710 = vmatpush1.msra.mxu0 %v285
        %711 = vmatprep.subr.mxu0 0.0
        %712 = vmatpush1.msra.mxu0 %v286
        %713 = vmatprep.subr.mxu0 0.0
        %714 = vmatpush1.msra.mxu0 0.0
        %715 = vmatprep.subr.mxu0 0.0
        %716 = vmatpush1.msra.mxu0 0.0
        %717 = vmatprep.subr.mxu0 0.0
        %718 = vmatpush1.msra.mxu0 0.0
        %719 = vmatprep.subr.mxu0 0.0
        %720 = vmatpush1.msra.mxu0 0.0
        %721 = vmatprep.subr.mxu0 0.0
        %722 = vmatpush1.msra.mxu0 0.0
        %723 = vmatprep.subr.mxu0 0.0
        %724 = vmatpush1.msra.mxu0 0.0
        %725 = vmatprep.subr.mxu0 0.0
        %726 = vmatpush1.msra.mxu0 0.0
        %727 = vmatprep.subr.mxu0 0.0
        %728 = vmatpush1.msra.mxu0 0.0
        %729 = vmatprep.subr.mxu0 0.0
        %730 = vmatpush1.msra.mxu0 0.0
        %731 = vmatprep.subr.mxu0 0.0
        %732 = vmatpush1.msra.mxu0 0.0
        %733 = vmatprep.subr.mxu0 0.0
        %734 = vmatpush1.msra.mxu0 0.0
        %735 = vmatprep.subr.mxu0 0.0
        %736 = vmatpush1.msra.mxu0 0.0
        %737 = vmatprep.subr.mxu0 0.0
        %738 = vmatpush1.msra.mxu0 0.0
        %739 = vmatprep.subr.mxu0 0.0
        %740 = vmatpush1.msra.mxu0 0.0
        %741 = vmatprep.subr.mxu0 0.0
        %742 = vmatpush1.msra.mxu0 0.0
        %743 = vmatprep.subr.mxu0 0.0
        %744 = vmatpush1.msra.mxu0 0.0
        %745 = vmatprep.subr.mxu0 0.0
        %746 = vmatpush1.msra.mxu0 0.0
        %747 = vmatprep.subr.mxu0 0.0
        %748 = vmatpush1.msra.mxu0 0.0
        %749 = vmatprep.subr.mxu0 0.0
        %750 = vmatpush1.msra.mxu0 0.0
        %751 = vmatprep.subr.mxu0 0.0
        %752 = vmatpush1.msra.mxu0 0.0
        %753 = vmatprep.subr.mxu0 0.0
        %754 = vmatpush1.msra.mxu0 0.0
        %755 = vmatprep.subr.mxu0 0.0
        %756 = vmatpush1.msra.mxu0 0.0
        %757 = vmatprep.subr.mxu0 0.0
        %758 = vmatpush1.msra.mxu0 0.0
        %759 = vmatprep.subr.mxu0 0.0
        %760 = vmatpush1.msra.mxu0 0.0
        %761 = vmatprep.subr.mxu0 0.0
        %762 = vmatpush1.msra.mxu0 0.0
        %763 = vmatprep.subr.mxu0 0.0
        %764 = vmatpush1.msra.mxu0 0.0
        %765 = vmatprep.subr.mxu0 0.0
        %766 = vmatpush1.msra.mxu0 0.0
        %767 = vmatprep.subr.mxu0 0.0
        %768 = vmatpush1.msra.mxu0 0.0
        %769 = vmatprep.subr.mxu0 0.0
        %770 = vmatpush1.msra.mxu0 0.0
        %771 = vmatprep.subr.mxu0 0.0
        %772 = vmatpush1.msra.mxu0 0.0
        %773 = vmatprep.mubr.f32.mxu0 0.0
        %774 = vmatmul.mubr.f32.gmra.mrb[0].mxu0 %v704
        %v775 = vpop.f32.mrb[0].mxu0
        %v776 = vadd.f32 0.0, %v775
        %v777 = vpop.f32.mrb[0].mxu0
        %778 = vmatprep.mubr.f32.mxu0 0.0
        %779 = vmatmul.mubr.f32.gmra.mrb[0].mxu0 %v707
        %v780 = vpop.f32.mrb[0].mxu0
        %v781 = vadd.f32 0.0, %v780
        %v782 = vpop.f32.mrb[0].mxu0
        %783 = vdwg.mxu0
        %v784 = vmul.f32 %v776, 1.402
        %v785 = vmul.f32 %v781, 1.402
        %v786 = vadd.f32 %v614, %v784
        %v787 = vadd.f32 %v619, %v785
        %v788 = vmul.f32 %v695, 0.344136
        %v789 = vmul.f32 %v700, 0.344136
        %v790 = vsub.f32 %v614, %v788
        %v791 = vsub.f32 %v619, %v789
        %v792 = vmul.f32 %v776, 0.714136
        %v793 = vmul.f32 %v781, 0.714136
        %v794 = vsub.f32 %v790, %v792
        %v795 = vsub.f32 %v791, %v793
        %v796 = vmul.f32 %v695, 1.772
        %v797 = vmul.f32 %v700, 1.772
        %v798 = vadd.f32 %v614, %v796
        %v799 = vadd.f32 %v619, %v797
        %v800 = vmax.f32 %v786, 0.0
        %v801 = vmax.f32 %v787, 0.0
        %v802 = vmin.f32 %v800, 255.0
        %v803 = vmin.f32 %v801, 255.0
        %v804 = vmul.f32 %v802, 0.003921569
        %v805 = vmul.f32 %v803, 0.003921569
        %806 = vst.msk [vmem:[%s280] sm:$0xff] %vm293, %v804
        %807 = vst.msk [vmem:[%s280 + $0x8] sm:$0xff] %vm293, %v805
        %v808 = vmax.f32 %v794, 0.0
        %v809 = vmax.f32 %v795, 0.0
        %v810 = vmin.f32 %v808, 255.0
        %v811 = vmin.f32 %v809, 255.0
        %v812 = vmul.f32 %v810, 0.003921569
        %v813 = vmul.f32 %v811, 0.003921569
        %s814 = scalar_lea.vmem %s280, 16 [#allocation3]
        %815 = vst.msk [vmem:[%s814] sm:$0xff] %vm293, %v812
        %816 = vst.msk [vmem:[%s814 + $0x8] sm:$0xff] %vm293, %v813
        %v817 = vmax.f32 %v798, 0.0
        %v818 = vmax.f32 %v799, 0.0
        %v819 = vmin.f32 %v817, 255.0
        %v820 = vmin.f32 %v818, 255.0
        %v821 = vmul.f32 %v819, 0.003921569
        %v822 = vmul.f32 %v820, 0.003921569
        %s823 = scalar_lea.vmem %s280, 32 [#allocation3]
        %824 = vst.msk [vmem:[%s823] sm:$0xff] %vm293, %v821
        %825 = vst.msk [vmem:[%s823 + $0x8] sm:$0xff] %vm293, %v822
        %s826 = sand.u32 %s142, 1
        %s827 = scalar_lea.sflag [#allocation4], %s826
        %s828 = sand.u32 %s142, 1
        %s829 = smul.addr %s828, 48
        %s830 = scalar_lea.vmem [#allocation3], %s829
        // Predicated region
        $region75: #{idct_forward.1} parent=69 // pred_check
          %p831 = pneg %p152
        $region76: #{idct_forward.1} parent=69 // pred_check_branch
          %833 = sbr.rel (%p831) target = $region78
        $region77: #{idct_forward.1} parent=69 // pred_region
          %s834 = smul.u32 2, %s24
          %s836 = ssub.s32 768, 768
          %837 = vsyncadd %s827, %s836
          %s838 = sadd.s32 %s25, %s834
          %s839 = smul.addr %s23, 6
          %s840 = sadd.s32 %s838, %s839
          %s841 = smul.addr %s840, 128
          %s842 = scalar_lea.hbm %s4, %s841
          %s843 = sshll.u32 %s830, 4
          %s844 = int_to_ptr.vmem [resolvable:$true] %s843
          %849 = dma.vmem_to_hbm [thread:$0]  %s844, 768, %s842, %s827, 128, 128, 8
        $region78: #{idct_forward.1} parent=69 // pred_fallthru
          _
      $region70: #{idct_forward.1} parent=5 // pred_fallthru
        _
      %p850 = scmp.le.s32.totalorder 2, %s13
      // Predicated region
      $region79: #{idct_forward.1} parent=5 // pred_check
        %p851 = pneg %p850
      $region80: #{idct_forward.1} parent=5 // pred_check_branch
        %853 = sbr.rel (%p851) target = $region82
      $region81: #{idct_forward.1} parent=5 // pred_region
        %s854 = ssub.s32 %s13, 2
        // Predicated region
        $region83: #{idct_forward.1} parent=81 // pred_check
          %p855 = pneg %p158
        $region84: #{idct_forward.1} parent=81 // pred_check_branch
          %857 = sbr.rel (%p855) target = $region86
        $region85: #{idct_forward.1} parent=81 // pred_region
          %s858 = sand.u32 %s143, 1
          %s859 = scalar_lea.sflag [#allocation4], %s858
          %s860 = sand.u32 %s143, 1
          %s861 = smul.addr %s860, 48
          %s862 = scalar_lea.vmem [#allocation3], %s861
          %863 = dma.done %s859, 768
        $region86: #{idct_forward.1} parent=81 // pred_fallthru
          _
      $region82: #{idct_forward.1} parent=5 // pred_fallthru
        _
    $region6: #{idct_forward.1} parent=1 // loop_footer
      %s17 = sadd.s32 1, %s13
    $region7: #{idct_forward.1} parent=1 // loop_footer_branch
      %12 = sbr.rel target = $region3
    $region8: #{idct_forward.1} parent=1 // loop_exit
      _
    %864 = vsyncpa [#allocation4], 1
    %s865 = scalar_lea.sflag [#allocation4], 1
    %866 = vsyncpa %s865, 1

</llo_original>
